<compile_context>
chip_gen: v5e
topology: v5e:2x2
jax: 0.10.0
libtpu: 0.0.40
codegen_flags: <defaults>
</compile_context>

<pallas_src>
import math

import jax
import jax.numpy as jnp
from jax.experimental import pallas as pl
from jax.experimental.pallas import tpu as pltpu

# ---------------- small synthetic sizes ----------------
B, S, H = 2, 8, 32          # batch, seq len, hidden (config.lm_hidden)
A_EMB, N_EMB = 16, 16       # a_emb, n_emb
VOCAB = 128                 # stand-in vocab size
SN = 8                      # neighbor token sequence length
N_NEIGH = 2                 # neighbors per entity
NM_PAD = 8                  # static cap on number of masked (MLM) tokens
ATTN_TYPE = "softmax"       # config.attn_type

LANE = 128
BS = B * S
NB_ROWS = B * 2 * N_NEIGH * SN

# weight slab: each weight starts on a 128-lane boundary (segment index * 128)
SEG_LMQ, SEG_LMK, SEG_LMV = 0, 1, 2
SEG_NB = 3
SEG_UQ, SEG_UK, SEG_UV = 4, 5, 6
SEG_L1 = 7
SEG_MT = 8
SEG_MD = 9
N_SEG = 10

# bias / small-parameter slab rows (each row is 128 lanes, payload left-aligned)
BR_LMQ, BR_LMK, BR_LMV = 0, 1, 2
BR_NB = 3
BR_UQ, BR_UK, BR_UV = 4, 5, 6
BR_U1, BR_U2 = 7, 8                      # w_attn_attr folded with attn_attr weight halves
BR_L1B = 9
BR_L2W0, BR_L2W1, BR_L2B = 10, 11, 12
BR_MT, BR_MG, BR_ME, BR_MD = 13, 14, 15, 16
BR_SCAL = 17                             # cols [cc, b_attn_w, b_attn_b]
BSL_ROWS = 24

OUT_ROWS = NM_PAD + 8                    # rows 0:NM_PAD mlm, rows NM_PAD:NM_PAD+B pair logp


def _gelu_tanh(h):
    return 0.5 * h * (1.0 + jnp.tanh(0.7978845608028654 * (h + 0.044715 * h * h * h)))


# =======================  the single fused kernel  =======================

def _fused_kernel(offs_ref, midx_ref,                 # SMEM scalar prefetch
                  emb_ref, aux_ref, nb_ref, w_ref, bsl_ref,
                  out_ref):
    f32 = jnp.float32

    def brow(r, n):                                   # (1, n) slice of the bias slab
        return bsl_ref[r:r + 1, 0:n]

    def softmax_last(s):
        s = s - jnp.max(s, axis=-1, keepdims=True)
        p = jnp.exp(s)
        return p * pl.reciprocal(jnp.sum(p, axis=-1, keepdims=True), approx=True)

    # ---------- stand-in language model: fused QKV + SDPA with additive key mask ----------
    x2 = emb_ref[...]                                                          # (BS, H)
    qkv = jnp.dot(x2, w_ref[:, 0:3 * LANE], preferred_element_type=f32)        # (BS, 384)
    q3 = (qkv[:, 0:H] + brow(BR_LMQ, H)).reshape(B, S, H)
    k3 = (qkv[:, LANE:LANE + H] + brow(BR_LMK, H)).reshape(B, S, H)
    v3 = (qkv[:, 2 * LANE:2 * LANE + H] + brow(BR_LMV, H)).reshape(B, S, H)
    bias_k = aux_ref[:, 0:S]                                                   # (B, S) precomputed
    sc = jnp.einsum('bqd,bkd->bqk', q3, k3, preferred_element_type=f32)
    sc = sc * (1.0 / math.sqrt(H)) + bias_k[:, None, :]
    xs3 = jnp.einsum('bqk,bkd->bqd', softmax_last(sc), v3, preferred_element_type=f32)
    xs2 = xs3.reshape(BS, H)                                                   # (BS, H)

    # ---------- stand-in neighbert + all neighbor cross-attentions (batched scores) ----------
    nb2 = nb_ref[...]                                                          # (NB_ROWS, H)
    embn = jnp.tanh(jnp.dot(nb2, w_ref[:, SEG_NB * LANE:SEG_NB * LANE + H],
                            preferred_element_type=f32) + brow(BR_NB, H))
    k_all = (jnp.dot(embn, w_ref[:, SEG_UK * LANE:SEG_UK * LANE + N_EMB],
                     preferred_element_type=f32) + brow(BR_UK, N_EMB))
    q_msg = (jnp.dot(xs2, w_ref[:, SEG_UQ * LANE:SEG_UQ * LANE + N_EMB],
                     preferred_element_type=f32) + brow(BR_UQ, N_EMB))
    q_msg3 = q_msg.reshape(B, S, N_EMB)
    k_all3 = k_all.reshape(B, 2 * N_NEIGH * SN, N_EMB)
    embn3 = embn.reshape(B, 2 * N_NEIGH * SN, H)
    sc_n = jnp.einsum('bqe,bke->bqk', q_msg3, k_all3,
                      preferred_element_type=f32) * (1.0 / math.sqrt(N_EMB))   # (B, S, 2N*SN)
    msgs = []
    for n in range(2 * N_NEIGH):
        pn = softmax_last(sc_n[:, :, n * SN:(n + 1) * SN])
        mn = jnp.einsum('bqk,bkd->bqd', pn, embn3[:, n * SN:(n + 1) * SN, :],
                        preferred_element_type=f32)                            # (B, S, H)
        msgs.append(mn.reshape(BS, H))

    # ---------- entity-span masks from SMEM offsets ----------
    pos_col = jax.lax.broadcasted_iota(jnp.int32, (BS, 1), 0)
    pos_row = jax.lax.broadcasted_iota(jnp.int32, (1, BS), 1)
    mpool_rows, maskT_cols = [], []
    for b in range(B):
        for e in range(2):
            s_i = offs_ref[b, 2 * e] + b * S
            e_i = offs_ref[b, 2 * e + 1] + b * S
            inv = 1.0 / jnp.maximum(offs_ref[b, 2 * e + 1] - offs_ref[b, 2 * e], 1).astype(f32)
            mpool_rows.append(jnp.logical_and(pos_row >= s_i, pos_row < e_i).astype(f32) * inv)
            maskT_cols.append(jnp.logical_and(pos_col >= s_i, pos_col < e_i).astype(f32))
    mpool = jnp.concatenate(mpool_rows, axis=0)                                # (2B, BS)  row = 2b+e
    maskT = jnp.concatenate(maskT_cols, axis=1)                                # (BS, 2B)

    # ---------- cal_attn: masked-pooling matmuls, softmax over each entity's neighbors ----------
    u1, u2 = brow(BR_U1, H), brow(BR_U2, H)
    cc = bsl_ref[BR_SCAL:BR_SCAL + 1, 0:1]
    b_w = bsl_ref[BR_SCAL:BR_SCAL + 1, 1:2]
    b_b = bsl_ref[BR_SCAL:BR_SCAL + 1, 2:3]
    fe_all = jnp.dot(mpool, xs2, preferred_element_type=f32)                   # (2B, H)
    t1 = jnp.sum(fe_all * u1, axis=-1, keepdims=True)                          # (2B, 1)
    mp = jnp.concatenate([jnp.sum(m * u2, axis=-1, keepdims=True) for m in msgs], axis=1)
    t2_all = jnp.dot(mpool, mp, preferred_element_type=f32)                    # (2B, 2N)
    rowpar = jax.lax.broadcasted_iota(jnp.int32, (2 * B, 1), 0) % 2            # 0 -> entity 1
    t2 = jnp.where(rowpar == 0, t2_all[:, 0:N_NEIGH], t2_all[:, N_NEIGH:2 * N_NEIGH])
    dist = jnp.concatenate([aux_ref[b:b + 1, S + e * N_NEIGH:S + (e + 1) * N_NEIGH]
                            for b in range(B) for e in range(2)], axis=0)      # (2B, N)
    raw = t1 + t2 + cc
    raw = jnp.where(raw >= 0.0, raw, 0.01 * raw)                               # LeakyReLU
    scn = raw + b_w * dist + b_b
    if ATTN_TYPE == "softmax":
        att = softmax_last(scn)
    elif ATTN_TYPE == "sigmoid":
        att = jax.nn.sigmoid(scn)
    else:  # "sigmoid_relu"
        att = jnp.maximum((jax.nn.sigmoid(scn) - 0.5) * 2.0, 0.0)

    # ---------- inject neighbor messages into the entity spans ----------
    zn = jnp.zeros_like(att)
    gatt = jnp.where(rowpar == 0,
                     jnp.concatenate([att, zn], axis=1),
                     jnp.concatenate([zn, att], axis=1))                       # (2B, 2N)
    coef = jnp.dot(maskT, gatt, preferred_element_type=f32)                    # (BS, 2N)
    x_upd = xs2
    for n in range(2 * N_NEIGH):
        x_upd = x_upd + coef[:, n:n + 1] * msgs[n]

    # ---------- UmpLayer self-attention with fused QKV (batched) ----------
    qkvu = jnp.dot(x_upd, w_ref[:, SEG_UQ * LANE:(SEG_UQ + 3) * LANE],
                   preferred_element_type=f32)                                 # (BS, 384)
    qu3 = (qkvu[:, 0:N_EMB] + brow(BR_UQ, N_EMB)).reshape(B, S, N_EMB)
    ku3 = (qkvu[:, LANE:LANE + N_EMB] + brow(BR_UK, N_EMB)).reshape(B, S, N_EMB)
    vu3 = (qkvu[:, 2 * LANE:2 * LANE + H] + brow(BR_UV, H)).reshape(B, S, H)
    su = jnp.einsum('bqe,bke->bqk', qu3, ku3,
                    preferred_element_type=f32) * (1.0 / math.sqrt(N_EMB))
    out3 = jnp.einsum('bqk,bkd->bqd', softmax_last(su), vu3, preferred_element_type=f32)
    out2 = out3.reshape(BS, H)                                                 # (BS, H)

    # ---------- MLM head on masked rows only (one-hot gather of NM_PAD rows) ----------
    g = jnp.concatenate([(pos_row == midx_ref[i]).astype(f32) for i in range(NM_PAD)], axis=0)
    mrows = jnp.dot(g, out2, preferred_element_type=f32)                       # (NM_PAD, H)
    hm = jnp.dot(mrows, w_ref[:, SEG_MT * LANE:SEG_MT * LANE + H],
                 preferred_element_type=f32) + brow(BR_MT, H)
    hm = _gelu_tanh(hm)
    mu = jnp.mean(hm, axis=-1, keepdims=True)
    var = jnp.mean((hm - mu) ** 2, axis=-1, keepdims=True)
    hm = (hm - mu) * jax.lax.rsqrt(var + 1e-12) * brow(BR_MG, H) + brow(BR_ME, H)
    mlm = jnp.dot(hm, w_ref[:, SEG_MD * LANE:(SEG_MD + 1) * LANE],
                  preferred_element_type=f32) + brow(BR_MD, VOCAB)             # (NM_PAD, VOCAB)

    # ---------- pair-classification head on the CLS token ----------
    cls = out3[:, 0, :]                                                        # (B, H)
    hp = _gelu_tanh(jnp.dot(cls, w_ref[:, SEG_L1 * LANE:SEG_L1 * LANE + A_EMB],
                            preferred_element_type=f32) + brow(BR_L1B, A_EMB))
    l0 = jnp.sum(hp * brow(BR_L2W0, A_EMB), axis=-1, keepdims=True)
    l1 = jnp.sum(hp * brow(BR_L2W1, A_EMB), axis=-1, keepdims=True)
    logits = jnp.concatenate([l0, l1], axis=1) + brow(BR_L2B, 2)               # (B, 2)
    logits = logits - jnp.max(logits, axis=-1, keepdims=True)
    logp = logits - jnp.log(jnp.sum(jnp.exp(logits), axis=-1, keepdims=True))

    # ---------- single lane-dense output slab: one unmasked full-tile store ----------
    pair_blk = jnp.concatenate([logp, jnp.zeros((B, VOCAB - 2), f32)], axis=1)
    pair_blk = jnp.concatenate(
        [pair_blk, jnp.zeros((OUT_ROWS - NM_PAD - B, VOCAB), f32)], axis=0)
    out_ref[...] = jnp.concatenate([mlm, pair_blk], axis=0)


def fused_forward(wslab, bslab, emb2, aux, nb2, offs, midx):
    grid_spec = pltpu.PrefetchScalarGridSpec(
        num_scalar_prefetch=2,
        grid=(1,),
        in_specs=[
            pl.BlockSpec((BS, H), lambda i, *_: (0, 0)),                 # token embeddings
            pl.BlockSpec((B, LANE), lambda i, *_: (0, 0)),               # aux: mask bias | dists
            pl.BlockSpec((NB_ROWS, H), lambda i, *_: (0, 0)),            # neighbor embeddings
            pl.BlockSpec((H, N_SEG * LANE), lambda i, *_: (0, 0)),       # weight slab
            pl.BlockSpec((BSL_ROWS, LANE), lambda i, *_: (0, 0)),        # bias/small slab
        ],
        out_specs=pl.BlockSpec((OUT_ROWS, VOCAB), lambda i, *_: (0, 0)),
    )
    return pl.pallas_call(
        _fused_kernel,
        out_shape=jax.ShapeDtypeStruct((OUT_ROWS, VOCAB), jnp.float32),
        grid_spec=grid_spec,
        compiler_params=pltpu.CompilerParams(dimension_semantics=("arbitrary",)),
    )(offs, midx, emb2, aux, nb2, wslab, bslab)


# =======================  model glue (plain JAX)  =======================

def init_params(key):
    ks = jax.random.split(key, 30)

    def w(i, shape, scale=0.02):
        return jax.random.normal(ks[i], shape, jnp.float32) * scale

    return {
        # stand-in language_model (BertModel)
        "lm_emb": w(0, (VOCAB, H), 0.1), "lm_pos": w(1, (S, H), 0.1),
        "lm_wq": w(2, (H, H)), "lm_bq": w(3, (H,)),
        "lm_wk": w(4, (H, H)), "lm_bk": w(5, (H,)),
        "lm_wv": w(6, (H, H)), "lm_bv": w(7, (H,)),
        # stand-in neighbert
        "nb_emb": w(8, (VOCAB, H), 0.1), "nb_w": w(9, (H, H)), "nb_b": w(10, (H,)),
        # UmpLayer
        "w_attn_attr_w": w(11, (H, A_EMB)), "w_attn_attr_b": w(12, (A_EMB,)),
        "attn_attr_w": w(13, (2 * A_EMB, 1)), "attn_attr_b": w(14, (1,)),
        "b_attn_attr_wb": w(15, (1, 2)),          # nn.Linear(1,1): [weight, bias]
        "query_w": w(16, (H, N_EMB)), "query_b": w(17, (N_EMB,)),
        "key_w": w(18, (H, N_EMB)), "key_b": w(19, (N_EMB,)),
        "value_w": w(20, (H, H)), "value_b": w(21, (H,)),
        # mlm_cls (BertLMPredictionHead stand-in)
        "mlm_wt": w(22, (H, H)), "mlm_bt": w(23, (H,)),
        "mlm_g": jnp.ones((H,), jnp.float32), "mlm_be": jnp.zeros((H,), jnp.float32),
        "mlm_wd": w(24, (H, VOCAB)), "mlm_bd": w(25, (VOCAB,)),
        # pair classification head
        "linear1_w": w(26, (H, A_EMB)), "linear1_b": w(27, (A_EMB,)),
        "linear2_w": w(28, (A_EMB, 2)), "linear2_b": w(29, (2,)),
    }


def pack_params(p):
    """Pack all weights into one lane-aligned slab and all biases/small params into one tile."""
    f32 = jnp.float32

    def seg(w_):
        return jnp.pad(w_, ((0, 0), (0, LANE - w_.shape[1])))

    wslab = jnp.concatenate([
        seg(p["lm_wq"]), seg(p["lm_wk"]), seg(p["lm_wv"]),
        seg(p["nb_w"]),
        seg(p["query_w"]), seg(p["key_w"]), seg(p["value_w"]),
        seg(p["linear1_w"]), seg(p["mlm_wt"]), p["mlm_wd"],
    ], axis=1)                                                        # (H, N_SEG*128)

    # fold w_attn_attr and the two halves of attn_attr into two H-vectors + one constant
    wa = p["attn_attr_w"][:, 0]
    wa1, wa2 = wa[:A_EMB], wa[A_EMB:]
    u1 = p["w_attn_attr_w"] @ wa1
    u2 = p["w_attn_attr_w"] @ wa2
    cc = p["w_attn_attr_b"] @ wa1 + p["w_attn_attr_b"] @ wa2 + p["attn_attr_b"][0]
    b_w, b_b = p["b_attn_attr_wb"][0, 0], p["b_attn_attr_wb"][0, 1]

    def row(v):
        v = jnp.asarray(v, f32).reshape(-1)
        return jnp.pad(v, (0, LANE - v.shape[0]))[None, :]

    rows = [
        row(p["lm_bq"]), row(p["lm_bk"]), row(p["lm_bv"]),
        row(p["nb_b"]),
        row(p["query_b"]), row(p["key_b"]), row(p["value_b"]),
        row(u1), row(u2),
        row(p["linear1_b"]),
        row(p["linear2_w"][:, 0]), row(p["linear2_w"][:, 1]), row(p["linear2_b"]),
        row(p["mlm_bt"]), row(p["mlm_g"]), row(p["mlm_be"]), row(p["mlm_bd"]),
        row(jnp.stack([cc, b_w, b_b])),
    ]
    bslab = jnp.concatenate(rows + [jnp.zeros((BSL_ROWS - len(rows), LANE), f32)], axis=0)
    return wslab, bslab


def forward(p, x, x_n, att_mask, batch_size, e12pos_list, token_labels, pair_labels):
    f32 = jnp.float32
    # ---- pack ragged python-side inputs into dense arrays ----
    # TODO(synk): assumes every entity has exactly N_NEIGH neighbors and non-empty spans
    #             (the torch zeros/ones fallback for empty neighbor lists is not modeled).
    neigh_tok = jnp.stack([jnp.stack(list(x_n[b]["neigh1_attr"]) + list(x_n[b]["neigh2_attr"]))
                           for b in range(batch_size)])                        # (B, 2N, SN)
    dists = jnp.stack([jnp.asarray(list(x_n[b]["dist1"]) + list(x_n[b]["dist2"]), f32)
                       for b in range(batch_size)])                            # (B, 2N)
    offs = jnp.asarray([[e12pos_list[b][0][0], e12pos_list[b][0][1],
                         e12pos_list[b][1][0], e12pos_list[b][1][1]]
                        for b in range(batch_size)], jnp.int32)                # (B, 4)

    emb2 = (p["lm_emb"][x] + p["lm_pos"][None, :x.shape[1], :]).reshape(batch_size * S, H)
    mask_bias = (1.0 - att_mask.astype(f32)) * (-1e9)                          # host-side bias
    aux = jnp.concatenate(
        [mask_bias, dists, jnp.zeros((batch_size, LANE - S - 2 * N_NEIGH), f32)], axis=1)
    nb2 = p["nb_emb"][neigh_tok].reshape(batch_size * 2 * N_NEIGH * SN, H)

    # masked-token row indices (static cap NM_PAD), fed to the kernel via SMEM prefetch
    labels_flat = token_labels.reshape(-1)
    valid = labels_flat != -100
    idx = jnp.nonzero(valid, size=NM_PAD, fill_value=-1)[0]
    row_valid = idx >= 0
    midx = jnp.maximum(idx, 0).astype(jnp.int32)
    row_labels = jnp.maximum(labels_flat[midx], 0)

    wslab, bslab = pack_params(p)
    out_slab = fused_forward(wslab, bslab, emb2, aux, nb2, offs, midx)         # (16, 128)

    # ---- MLM loss over the gathered masked rows ----
    scores = out_slab[:NM_PAD, :]
    logp = jax.nn.log_softmax(scores, axis=-1)
    nll = -jnp.take_along_axis(logp, row_labels[:, None], axis=1)[:, 0]
    masked_lm_loss = (jnp.sum(jnp.where(row_valid, nll, 0.0))
                      / jnp.maximum(jnp.sum(row_valid), 1))

    # ---- pair classification loss (NLLLoss over in-kernel log_softmax) ----
    cls_logp = out_slab[NM_PAD:NM_PAD + batch_size, 0:2]
    pair_cls_loss = -jnp.mean(jnp.take_along_axis(cls_logp, pair_labels[:, None], axis=1)[:, 0])
    return masked_lm_loss, pair_cls_loss


# =======================  demo  =======================

if __name__ == "__main__":
    key = jax.random.PRNGKey(0)
    kp, kx, kn = jax.random.split(key, 3)
    params = init_params(kp)

    x = jax.random.randint(kx, (B, S), 0, VOCAB, jnp.int32)
    att_mask = jnp.ones((B, S), jnp.int32).at[1, S - 1].set(0)
    e12pos_list = [[(1, 3), (5, 7)], [(2, 4), (6, 8)]]

    neigh_keys = jax.random.split(kn, B * 2 * N_NEIGH)
    x_n, ki = [], 0
    for b in range(B):
        d = {"neigh1_attr": [], "neigh2_attr": [], "dist1": [], "dist2": []}
        for j in range(N_NEIGH):
            d["neigh1_attr"].append(jax.random.randint(neigh_keys[ki], (SN,), 0, VOCAB, jnp.int32)); ki += 1
            d["neigh2_attr"].append(jax.random.randint(neigh_keys[ki], (SN,), 0, VOCAB, jnp.int32)); ki += 1
            d["dist1"].append(float(j + 1 + b))
            d["dist2"].append(float(2 * j + 1))
        x_n.append(d)

    token_labels = jnp.full((B, S), -100, jnp.int32)
    token_labels = token_labels.at[0, 2].set(17).at[0, 5].set(42).at[1, 3].set(7)
    pair_labels = jnp.array([0, 1], jnp.int32)

    mlm_loss, pair_loss = forward(params, x, x_n, att_mask, B, e12pos_list,
                                  token_labels, pair_labels)
    jax.block_until_ready((mlm_loss, pair_loss))
    assert mlm_loss.shape == () and pair_loss.shape == ()
    assert bool(jnp.isfinite(mlm_loss)) and bool(jnp.isfinite(pair_loss))
    print("KERNEL_OK")
</pallas_src>

<mosaic_0001>
module attributes {stable_mosaic.version = 11 : i64} {
  func.func @_fused_kernel(%arg0: i32, %arg1: memref<2x4xi32, #tpu.memory_space<smem>>, %arg2: memref<8xi32, #tpu.memory_space<smem>>, %arg3: memref<16x32xf32, #tpu.memory_space<vmem>>, %arg4: memref<2x128xf32, #tpu.memory_space<vmem>>, %arg5: memref<64x32xf32, #tpu.memory_space<vmem>>, %arg6: memref<32x1280xf32, #tpu.memory_space<vmem>>, %arg7: memref<24x128xf32, #tpu.memory_space<vmem>>, %arg8: memref<16x128xf32, #tpu.memory_space<vmem>>) attributes {dimension_semantics = [#tpu.dimension_semantics<arbitrary>], iteration_bounds = array<i64: 1>, scalar_prefetch = 2 : i64, scratch_operands = 0 : i64, tpu.core_type = #tpu.core_type<tc>, window_params = [{pipeline_mode = #tpu.pipeline_mode<synchronous>, transform_indices = @transform_0, window_bounds = array<i64: 16, 32>}, {pipeline_mode = #tpu.pipeline_mode<synchronous>, transform_indices = @transform_1, window_bounds = array<i64: 2, 128>}, {pipeline_mode = #tpu.pipeline_mode<synchronous>, transform_indices = @transform_2, window_bounds = array<i64: 64, 32>}, {pipeline_mode = #tpu.pipeline_mode<synchronous>, transform_indices = @transform_3, window_bounds = array<i64: 32, 1280>}, {pipeline_mode = #tpu.pipeline_mode<synchronous>, transform_indices = @transform_4, window_bounds = array<i64: 24, 128>}, {pipeline_mode = #tpu.pipeline_mode<synchronous>, transform_indices = @transform_5, window_bounds = array<i64: 16, 128>}]} {
    %c0 = arith.constant 0 : index
    %c0_0 = arith.constant 0 : index
    %0 = vector.load %arg3[%c0, %c0_0] : memref<16x32xf32, #tpu.memory_space<vmem>>, vector<16x32xf32>
    %c0_1 = arith.constant 0 : index
    %c0_2 = arith.constant 0 : index
    %1 = vector.load %arg6[%c0_1, %c0_2] : memref<32x1280xf32, #tpu.memory_space<vmem>>, vector<32x384xf32>
    %cst = arith.constant dense<0.000000e+00> : vector<16x384xf32>
    %2 = tpu.matmul %0, %1, %cst {dimension_numbers = #tpu.dot_dimension_numbers<[1], [0], [0], [1], [0, 0, 1, 1], [], []>} : vector<16x32xf32>, vector<32x384xf32>, vector<16x384xf32> -> vector<16x384xf32>
    %3 = vector.extract_strided_slice %2 {offsets = [0, 0], sizes = [16, 32], strides = [1, 1]} : vector<16x384xf32> to vector<16x32xf32>
    %c0_3 = arith.constant 0 : index
    %c0_4 = arith.constant 0 : index
    %4 = vector.load %arg7[%c0_3, %c0_4] : memref<24x128xf32, #tpu.memory_space<vmem>>, vector<1x32xf32>
    %5 = vector.broadcast %4 : vector<1x32xf32> to vector<16x32xf32>
    %6 = arith.addf %3, %5 : vector<16x32xf32>
    %7 = vector.shape_cast %6 : vector<16x32xf32> to vector<2x8x32xf32>
    %8 = vector.extract_strided_slice %2 {offsets = [0, 128], sizes = [16, 32], strides = [1, 1]} : vector<16x384xf32> to vector<16x32xf32>
    %c1 = arith.constant 1 : index
    %c0_5 = arith.constant 0 : index
    %9 = vector.load %arg7[%c1, %c0_5] : memref<24x128xf32, #tpu.memory_space<vmem>>, vector<1x32xf32>
    %10 = vector.broadcast %9 : vector<1x32xf32> to vector<16x32xf32>
    %11 = arith.addf %8, %10 : vector<16x32xf32>
    %12 = vector.shape_cast %11 : vector<16x32xf32> to vector<2x8x32xf32>
    %13 = vector.extract_strided_slice %2 {offsets = [0, 256], sizes = [16, 32], strides = [1, 1]} : vector<16x384xf32> to vector<16x32xf32>
    %c2 = arith.constant 2 : index
    %c0_6 = arith.constant 0 : index
    %14 = vector.load %arg7[%c2, %c0_6] : memref<24x128xf32, #tpu.memory_space<vmem>>, vector<1x32xf32>
    %15 = vector.broadcast %14 : vector<1x32xf32> to vector<16x32xf32>
    %16 = arith.addf %13, %15 : vector<16x32xf32>
    %17 = vector.shape_cast %16 : vector<16x32xf32> to vector<2x8x32xf32>
    %c0_7 = arith.constant 0 : index
    %c0_8 = arith.constant 0 : index
    %18 = vector.load %arg4[%c0_7, %c0_8] : memref<2x128xf32, #tpu.memory_space<vmem>>, vector<2x8xf32>
    "tpu.trace_start"() <{level = 10 : i32, message = "bqd,bkd->bqk"}> : () -> ()
    %cst_9 = arith.constant dense<0.000000e+00> : vector<2x8x8xf32>
    %19 = tpu.matmul %7, %12, %cst_9 {dimension_numbers = #tpu.dot_dimension_numbers<[2], [2], [1], [1], [0, 0, 0, 1, 1, 1], [0], [0]>} : vector<2x8x32xf32>, vector<2x8x32xf32>, vector<2x8x8xf32> -> vector<2x8x8xf32>
    "tpu.trace_stop"() : () -> ()
    %cst_10 = arith.constant 0.176776692 : f32
    %20 = vector.broadcast %cst_10 : f32 to vector<2x8x8xf32>
    %21 = arith.mulf %19, %20 : vector<2x8x8xf32>
    %22 = vector.shape_cast %18 : vector<2x8xf32> to vector<2x1x8xf32>
    %23 = vector.broadcast %22 : vector<2x1x8xf32> to vector<2x8x8xf32>
    %24 = arith.addf %21, %23 : vector<2x8x8xf32>
    %cst_11 = arith.constant dense<0xFF800000> : vector<2x8xf32>
    %25 = vector.multi_reduction <maximumf>, %24, %cst_11 [2] : vector<2x8x8xf32> to vector<2x8xf32>
    %26 = vector.shape_cast %25 : vector<2x8xf32> to vector<2x8x1xf32>
    %27 = vector.broadcast %26 : vector<2x8x1xf32> to vector<2x8x8xf32>
    %28 = arith.subf %24, %27 : vector<2x8x8xf32>
    %29 = math.exp %28 : vector<2x8x8xf32>
    %cst_12 = arith.constant dense<0.000000e+00> : vector<2x8xf32>
    %30 = vector.multi_reduction <add>, %29, %cst_12 [2] : vector<2x8x8xf32> to vector<2x8xf32>
    %31 = vector.shape_cast %30 : vector<2x8xf32> to vector<2x8x1xf32>
    %32 = tpu.reciprocal %31 {approx = true} : vector<2x8x1xf32> -> vector<2x8x1xf32>
    %33 = vector.broadcast %32 : vector<2x8x1xf32> to vector<2x8x8xf32>
    %34 = arith.mulf %29, %33 : vector<2x8x8xf32>
    "tpu.trace_start"() <{level = 10 : i32, message = "bqk,bkd->bqd"}> : () -> ()
    %cst_13 = arith.constant dense<0.000000e+00> : vector<2x8x32xf32>
    %35 = tpu.matmul %34, %17, %cst_13 {dimension_numbers = #tpu.dot_dimension_numbers<[2], [1], [1], [2], [0, 0, 0, 1, 1, 2], [0], [0]>} : vector<2x8x8xf32>, vector<2x8x32xf32>, vector<2x8x32xf32> -> vector<2x8x32xf32>
    "tpu.trace_stop"() : () -> ()
    %36 = vector.shape_cast %35 : vector<2x8x32xf32> to vector<16x32xf32>
    %c0_14 = arith.constant 0 : index
    %c0_15 = arith.constant 0 : index
    %37 = vector.load %arg5[%c0_14, %c0_15] : memref<64x32xf32, #tpu.memory_space<vmem>>, vector<64x32xf32>
    %c0_16 = arith.constant 0 : index
    %c384 = arith.constant 384 : index
    %38 = vector.load %arg6[%c0_16, %c384] : memref<32x1280xf32, #tpu.memory_space<vmem>>, vector<32x32xf32>
    %cst_17 = arith.constant dense<0.000000e+00> : vector<64x32xf32>
    %39 = tpu.matmul %37, %38, %cst_17 {dimension_numbers = #tpu.dot_dimension_numbers<[1], [0], [0], [1], [0, 0, 1, 1], [], []>} : vector<64x32xf32>, vector<32x32xf32>, vector<64x32xf32> -> vector<64x32xf32>
    %c3 = arith.constant 3 : index
    %c0_18 = arith.constant 0 : index
    %40 = vector.load %arg7[%c3, %c0_18] : memref<24x128xf32, #tpu.memory_space<vmem>>, vector<1x32xf32>
    %41 = vector.broadcast %40 : vector<1x32xf32> to vector<64x32xf32>
    %42 = arith.addf %39, %41 : vector<64x32xf32>
    %43 = math.tanh %42 : vector<64x32xf32>
    %c0_19 = arith.constant 0 : index
    %c640 = arith.constant 640 : index
    %44 = vector.load %arg6[%c0_19, %c640] : memref<32x1280xf32, #tpu.memory_space<vmem>>, vector<32x16xf32>
    %cst_20 = arith.constant dense<0.000000e+00> : vector<64x16xf32>
    %45 = tpu.matmul %43, %44, %cst_20 {dimension_numbers = #tpu.dot_dimension_numbers<[1], [0], [0], [1], [0, 0, 1, 1], [], []>} : vector<64x32xf32>, vector<32x16xf32>, vector<64x16xf32> -> vector<64x16xf32>
    %c5 = arith.constant 5 : index
    %c0_21 = arith.constant 0 : index
    %46 = vector.load %arg7[%c5, %c0_21] : memref<24x128xf32, #tpu.memory_space<vmem>>, vector<1x16xf32>
    %47 = vector.broadcast %46 : vector<1x16xf32> to vector<64x16xf32>
    %48 = arith.addf %45, %47 : vector<64x16xf32>
    %c0_22 = arith.constant 0 : index
    %c512 = arith.constant 512 : index
    %49 = vector.load %arg6[%c0_22, %c512] : memref<32x1280xf32, #tpu.memory_space<vmem>>, vector<32x16xf32>
    %cst_23 = arith.constant dense<0.000000e+00> : vector<16x16xf32>
    %50 = tpu.matmul %36, %49, %cst_23 {dimension_numbers = #tpu.dot_dimension_numbers<[1], [0], [0], [1], [0, 0, 1, 1], [], []>} : vector<16x32xf32>, vector<32x16xf32>, vector<16x16xf32> -> vector<16x16xf32>
    %c4 = arith.constant 4 : index
    %c0_24 = arith.constant 0 : index
    %51 = vector.load %arg7[%c4, %c0_24] : memref<24x128xf32, #tpu.memory_space<vmem>>, vector<1x16xf32>
    %52 = vector.broadcast %51 : vector<1x16xf32> to vector<16x16xf32>
    %53 = arith.addf %50, %52 : vector<16x16xf32>
    %54 = vector.shape_cast %53 : vector<16x16xf32> to vector<2x8x16xf32>
    %55 = vector.shape_cast %48 : vector<64x16xf32> to vector<2x32x16xf32>
    %56 = vector.shape_cast %43 : vector<64x32xf32> to vector<2x32x32xf32>
    "tpu.trace_start"() <{level = 10 : i32, message = "bqe,bke->bqk"}> : () -> ()
    %cst_25 = arith.constant dense<0.000000e+00> : vector<2x8x32xf32>
    %57 = tpu.matmul %54, %55, %cst_25 {dimension_numbers = #tpu.dot_dimension_numbers<[2], [2], [1], [1], [0, 0, 0, 1, 1, 1], [0], [0]>} : vector<2x8x16xf32>, vector<2x32x16xf32>, vector<2x8x32xf32> -> vector<2x8x32xf32>
    "tpu.trace_stop"() : () -> ()
    %cst_26 = arith.constant 2.500000e-01 : f32
    %58 = vector.broadcast %cst_26 : f32 to vector<2x8x32xf32>
    %59 = arith.mulf %57, %58 : vector<2x8x32xf32>
    %60 = vector.extract_strided_slice %59 {offsets = [0, 0, 0], sizes = [2, 8, 8], strides = [1, 1, 1]} : vector<2x8x32xf32> to vector<2x8x8xf32>
    %cst_27 = arith.constant dense<0xFF800000> : vector<2x8xf32>
    %61 = vector.multi_reduction <maximumf>, %60, %cst_27 [2] : vector<2x8x8xf32> to vector<2x8xf32>
    %62 = vector.shape_cast %61 : vector<2x8xf32> to vector<2x8x1xf32>
    %63 = vector.broadcast %62 : vector<2x8x1xf32> to vector<2x8x8xf32>
    %64 = arith.subf %60, %63 : vector<2x8x8xf32>
    %65 = math.exp %64 : vector<2x8x8xf32>
    %cst_28 = arith.constant dense<0.000000e+00> : vector<2x8xf32>
    %66 = vector.multi_reduction <add>, %65, %cst_28 [2] : vector<2x8x8xf32> to vector<2x8xf32>
    %67 = vector.shape_cast %66 : vector<2x8xf32> to vector<2x8x1xf32>
    %68 = tpu.reciprocal %67 {approx = true} : vector<2x8x1xf32> -> vector<2x8x1xf32>
    %69 = vector.broadcast %68 : vector<2x8x1xf32> to vector<2x8x8xf32>
    %70 = arith.mulf %65, %69 : vector<2x8x8xf32>
    %71 = vector.extract_strided_slice %56 {offsets = [0, 0, 0], sizes = [2, 8, 32], strides = [1, 1, 1]} : vector<2x32x32xf32> to vector<2x8x32xf32>
    "tpu.trace_start"() <{level = 10 : i32, message = "bqk,bkd->bqd"}> : () -> ()
    %cst_29 = arith.constant dense<0.000000e+00> : vector<2x8x32xf32>
    %72 = tpu.matmul %70, %71, %cst_29 {dimension_numbers = #tpu.dot_dimension_numbers<[2], [1], [1], [2], [0, 0, 0, 1, 1, 2], [0], [0]>} : vector<2x8x8xf32>, vector<2x8x32xf32>, vector<2x8x32xf32> -> vector<2x8x32xf32>
    "tpu.trace_stop"() : () -> ()
    %73 = vector.shape_cast %72 : vector<2x8x32xf32> to vector<16x32xf32>
    %74 = vector.extract_strided_slice %59 {offsets = [0, 0, 8], sizes = [2, 8, 8], strides = [1, 1, 1]} : vector<2x8x32xf32> to vector<2x8x8xf32>
    %cst_30 = arith.constant dense<0xFF800000> : vector<2x8xf32>
    %75 = vector.multi_reduction <maximumf>, %74, %cst_30 [2] : vector<2x8x8xf32> to vector<2x8xf32>
    %76 = vector.shape_cast %75 : vector<2x8xf32> to vector<2x8x1xf32>
    %77 = vector.broadcast %76 : vector<2x8x1xf32> to vector<2x8x8xf32>
    %78 = arith.subf %74, %77 : vector<2x8x8xf32>
    %79 = math.exp %78 : vector<2x8x8xf32>
    %cst_31 = arith.constant dense<0.000000e+00> : vector<2x8xf32>
    %80 = vector.multi_reduction <add>, %79, %cst_31 [2] : vector<2x8x8xf32> to vector<2x8xf32>
    %81 = vector.shape_cast %80 : vector<2x8xf32> to vector<2x8x1xf32>
    %82 = tpu.reciprocal %81 {approx = true} : vector<2x8x1xf32> -> vector<2x8x1xf32>
    %83 = vector.broadcast %82 : vector<2x8x1xf32> to vector<2x8x8xf32>
    %84 = arith.mulf %79, %83 : vector<2x8x8xf32>
    %85 = vector.extract_strided_slice %56 {offsets = [0, 8, 0], sizes = [2, 8, 32], strides = [1, 1, 1]} : vector<2x32x32xf32> to vector<2x8x32xf32>
    "tpu.trace_start"() <{level = 10 : i32, message = "bqk,bkd->bqd"}> : () -> ()
    %cst_32 = arith.constant dense<0.000000e+00> : vector<2x8x32xf32>
    %86 = tpu.matmul %84, %85, %cst_32 {dimension_numbers = #tpu.dot_dimension_numbers<[2], [1], [1], [2], [0, 0, 0, 1, 1, 2], [0], [0]>} : vector<2x8x8xf32>, vector<2x8x32xf32>, vector<2x8x32xf32> -> vector<2x8x32xf32>
    "tpu.trace_stop"() : () -> ()
    %87 = vector.shape_cast %86 : vector<2x8x32xf32> to vector<16x32xf32>
    %88 = vector.extract_strided_slice %59 {offsets = [0, 0, 16], sizes = [2, 8, 8], strides = [1, 1, 1]} : vector<2x8x32xf32> to vector<2x8x8xf32>
    %cst_33 = arith.constant dense<0xFF800000> : vector<2x8xf32>
    %89 = vector.multi_reduction <maximumf>, %88, %cst_33 [2] : vector<2x8x8xf32> to vector<2x8xf32>
    %90 = vector.shape_cast %89 : vector<2x8xf32> to vector<2x8x1xf32>
    %91 = vector.broadcast %90 : vector<2x8x1xf32> to vector<2x8x8xf32>
    %92 = arith.subf %88, %91 : vector<2x8x8xf32>
    %93 = math.exp %92 : vector<2x8x8xf32>
    %cst_34 = arith.constant dense<0.000000e+00> : vector<2x8xf32>
    %94 = vector.multi_reduction <add>, %93, %cst_34 [2] : vector<2x8x8xf32> to vector<2x8xf32>
    %95 = vector.shape_cast %94 : vector<2x8xf32> to vector<2x8x1xf32>
    %96 = tpu.reciprocal %95 {approx = true} : vector<2x8x1xf32> -> vector<2x8x1xf32>
    %97 = vector.broadcast %96 : vector<2x8x1xf32> to vector<2x8x8xf32>
    %98 = arith.mulf %93, %97 : vector<2x8x8xf32>
    %99 = vector.extract_strided_slice %56 {offsets = [0, 16, 0], sizes = [2, 8, 32], strides = [1, 1, 1]} : vector<2x32x32xf32> to vector<2x8x32xf32>
    "tpu.trace_start"() <{level = 10 : i32, message = "bqk,bkd->bqd"}> : () -> ()
    %cst_35 = arith.constant dense<0.000000e+00> : vector<2x8x32xf32>
    %100 = tpu.matmul %98, %99, %cst_35 {dimension_numbers = #tpu.dot_dimension_numbers<[2], [1], [1], [2], [0, 0, 0, 1, 1, 2], [0], [0]>} : vector<2x8x8xf32>, vector<2x8x32xf32>, vector<2x8x32xf32> -> vector<2x8x32xf32>
    "tpu.trace_stop"() : () -> ()
    %101 = vector.shape_cast %100 : vector<2x8x32xf32> to vector<16x32xf32>
    %102 = vector.extract_strided_slice %59 {offsets = [0, 0, 24], sizes = [2, 8, 8], strides = [1, 1, 1]} : vector<2x8x32xf32> to vector<2x8x8xf32>
    %cst_36 = arith.constant dense<0xFF800000> : vector<2x8xf32>
    %103 = vector.multi_reduction <maximumf>, %102, %cst_36 [2] : vector<2x8x8xf32> to vector<2x8xf32>
    %104 = vector.shape_cast %103 : vector<2x8xf32> to vector<2x8x1xf32>
    %105 = vector.broadcast %104 : vector<2x8x1xf32> to vector<2x8x8xf32>
    %106 = arith.subf %102, %105 : vector<2x8x8xf32>
    %107 = math.exp %106 : vector<2x8x8xf32>
    %cst_37 = arith.constant dense<0.000000e+00> : vector<2x8xf32>
    %108 = vector.multi_reduction <add>, %107, %cst_37 [2] : vector<2x8x8xf32> to vector<2x8xf32>
    %109 = vector.shape_cast %108 : vector<2x8xf32> to vector<2x8x1xf32>
    %110 = tpu.reciprocal %109 {approx = true} : vector<2x8x1xf32> -> vector<2x8x1xf32>
    %111 = vector.broadcast %110 : vector<2x8x1xf32> to vector<2x8x8xf32>
    %112 = arith.mulf %107, %111 : vector<2x8x8xf32>
    %113 = vector.extract_strided_slice %56 {offsets = [0, 24, 0], sizes = [2, 8, 32], strides = [1, 1, 1]} : vector<2x32x32xf32> to vector<2x8x32xf32>
    "tpu.trace_start"() <{level = 10 : i32, message = "bqk,bkd->bqd"}> : () -> ()
    %cst_38 = arith.constant dense<0.000000e+00> : vector<2x8x32xf32>
    %114 = tpu.matmul %112, %113, %cst_38 {dimension_numbers = #tpu.dot_dimension_numbers<[2], [1], [1], [2], [0, 0, 0, 1, 1, 2], [0], [0]>} : vector<2x8x8xf32>, vector<2x8x32xf32>, vector<2x8x32xf32> -> vector<2x8x32xf32>
    "tpu.trace_stop"() : () -> ()
    %115 = vector.shape_cast %114 : vector<2x8x32xf32> to vector<16x32xf32>
    %116 = tpu.iota {dimensions = array<i32: 0>} : vector<16x1xi32>
    %117 = tpu.iota {dimensions = array<i32: 1>} : vector<1x16xi32>
    %c0_39 = arith.constant 0 : index
    %c0_40 = arith.constant 0 : index
    %118 = memref.load %arg1[%c0_39, %c0_40] : memref<2x4xi32, #tpu.memory_space<smem>>
    %c0_i32 = arith.constant 0 : i32
    %119 = arith.addi %118, %c0_i32 : i32
    %c0_41 = arith.constant 0 : index
    %c1_42 = arith.constant 1 : index
    %120 = memref.load %arg1[%c0_41, %c1_42] : memref<2x4xi32, #tpu.memory_space<smem>>
    %c0_i32_43 = arith.constant 0 : i32
    %121 = arith.addi %120, %c0_i32_43 : i32
    %c0_44 = arith.constant 0 : index
    %c1_45 = arith.constant 1 : index
    %122 = memref.load %arg1[%c0_44, %c1_45] : memref<2x4xi32, #tpu.memory_space<smem>>
    %c0_46 = arith.constant 0 : index
    %c0_47 = arith.constant 0 : index
    %123 = memref.load %arg1[%c0_46, %c0_47] : memref<2x4xi32, #tpu.memory_space<smem>>
    %124 = arith.subi %122, %123 : i32
    %c1_i32 = arith.constant 1 : i32
    %125 = arith.maxsi %124, %c1_i32 : i32
    %126 = arith.sitofp %125 : i32 to f32
    %cst_48 = arith.constant 1.000000e+00 : f32
    %127 = arith.divf %cst_48, %126 : f32
    %128 = vector.broadcast %119 : i32 to vector<1x16xi32>
    %129 = arith.cmpi sge, %117, %128 : vector<1x16xi32>
    %130 = vector.broadcast %121 : i32 to vector<1x16xi32>
    %131 = arith.cmpi slt, %117, %130 : vector<1x16xi32>
    %132 = arith.andi %129, %131 : vector<1x16xi1>
    %133 = arith.extui %132 : vector<1x16xi1> to vector<1x16xi32>
    %134 = arith.sitofp %133 : vector<1x16xi32> to vector<1x16xf32>
    %135 = vector.broadcast %127 : f32 to vector<1x16xf32>
    %136 = arith.mulf %134, %135 : vector<1x16xf32>
    %137 = vector.broadcast %119 : i32 to vector<16x1xi32>
    %138 = arith.cmpi sge, %116, %137 : vector<16x1xi32>
    %139 = vector.broadcast %121 : i32 to vector<16x1xi32>
    %140 = arith.cmpi slt, %116, %139 : vector<16x1xi32>
    %141 = arith.andi %138, %140 : vector<16x1xi1>
    %142 = arith.extui %141 : vector<16x1xi1> to vector<16x1xi32>
    %143 = arith.sitofp %142 : vector<16x1xi32> to vector<16x1xf32>
    %c0_49 = arith.constant 0 : index
    %c2_50 = arith.constant 2 : index
    %144 = memref.load %arg1[%c0_49, %c2_50] : memref<2x4xi32, #tpu.memory_space<smem>>
    %c0_i32_51 = arith.constant 0 : i32
    %145 = arith.addi %144, %c0_i32_51 : i32
    %c0_52 = arith.constant 0 : index
    %c3_53 = arith.constant 3 : index
    %146 = memref.load %arg1[%c0_52, %c3_53] : memref<2x4xi32, #tpu.memory_space<smem>>
    %c0_i32_54 = arith.constant 0 : i32
    %147 = arith.addi %146, %c0_i32_54 : i32
    %c0_55 = arith.constant 0 : index
    %c3_56 = arith.constant 3 : index
    %148 = memref.load %arg1[%c0_55, %c3_56] : memref<2x4xi32, #tpu.memory_space<smem>>
    %c0_57 = arith.constant 0 : index
    %c2_58 = arith.constant 2 : index
    %149 = memref.load %arg1[%c0_57, %c2_58] : memref<2x4xi32, #tpu.memory_space<smem>>
    %150 = arith.subi %148, %149 : i32
    %c1_i32_59 = arith.constant 1 : i32
    %151 = arith.maxsi %150, %c1_i32_59 : i32
    %152 = arith.sitofp %151 : i32 to f32
    %cst_60 = arith.constant 1.000000e+00 : f32
    %153 = arith.divf %cst_60, %152 : f32
    %154 = vector.broadcast %145 : i32 to vector<1x16xi32>
    %155 = arith.cmpi sge, %117, %154 : vector<1x16xi32>
    %156 = vector.broadcast %147 : i32 to vector<1x16xi32>
    %157 = arith.cmpi slt, %117, %156 : vector<1x16xi32>
    %158 = arith.andi %155, %157 : vector<1x16xi1>
    %159 = arith.extui %158 : vector<1x16xi1> to vector<1x16xi32>
    %160 = arith.sitofp %159 : vector<1x16xi32> to vector<1x16xf32>
    %161 = vector.broadcast %153 : f32 to vector<1x16xf32>
    %162 = arith.mulf %160, %161 : vector<1x16xf32>
    %163 = vector.broadcast %145 : i32 to vector<16x1xi32>
    %164 = arith.cmpi sge, %116, %163 : vector<16x1xi32>
    %165 = vector.broadcast %147 : i32 to vector<16x1xi32>
    %166 = arith.cmpi slt, %116, %165 : vector<16x1xi32>
    %167 = arith.andi %164, %166 : vector<16x1xi1>
    %168 = arith.extui %167 : vector<16x1xi1> to vector<16x1xi32>
    %169 = arith.sitofp %168 : vector<16x1xi32> to vector<16x1xf32>
    %c1_61 = arith.constant 1 : index
    %c0_62 = arith.constant 0 : index
    %170 = memref.load %arg1[%c1_61, %c0_62] : memref<2x4xi32, #tpu.memory_space<smem>>
    %c8_i32 = arith.constant 8 : i32
    %171 = arith.addi %170, %c8_i32 : i32
    %c1_63 = arith.constant 1 : index
    %c1_64 = arith.constant 1 : index
    %172 = memref.load %arg1[%c1_63, %c1_64] : memref<2x4xi32, #tpu.memory_space<smem>>
    %c8_i32_65 = arith.constant 8 : i32
    %173 = arith.addi %172, %c8_i32_65 : i32
    %c1_66 = arith.constant 1 : index
    %c1_67 = arith.constant 1 : index
    %174 = memref.load %arg1[%c1_66, %c1_67] : memref<2x4xi32, #tpu.memory_space<smem>>
    %c1_68 = arith.constant 1 : index
    %c0_69 = arith.constant 0 : index
    %175 = memref.load %arg1[%c1_68, %c0_69] : memref<2x4xi32, #tpu.memory_space<smem>>
    %176 = arith.subi %174, %175 : i32
    %c1_i32_70 = arith.constant 1 : i32
    %177 = arith.maxsi %176, %c1_i32_70 : i32
    %178 = arith.sitofp %177 : i32 to f32
    %cst_71 = arith.constant 1.000000e+00 : f32
    %179 = arith.divf %cst_71, %178 : f32
    %180 = vector.broadcast %171 : i32 to vector<1x16xi32>
    %181 = arith.cmpi sge, %117, %180 : vector<1x16xi32>
    %182 = vector.broadcast %173 : i32 to vector<1x16xi32>
    %183 = arith.cmpi slt, %117, %182 : vector<1x16xi32>
    %184 = arith.andi %181, %183 : vector<1x16xi1>
    %185 = arith.extui %184 : vector<1x16xi1> to vector<1x16xi32>
    %186 = arith.sitofp %185 : vector<1x16xi32> to vector<1x16xf32>
    %187 = vector.broadcast %179 : f32 to vector<1x16xf32>
    %188 = arith.mulf %186, %187 : vector<1x16xf32>
    %189 = vector.broadcast %171 : i32 to vector<16x1xi32>
    %190 = arith.cmpi sge, %116, %189 : vector<16x1xi32>
    %191 = vector.broadcast %173 : i32 to vector<16x1xi32>
    %192 = arith.cmpi slt, %116, %191 : vector<16x1xi32>
    %193 = arith.andi %190, %192 : vector<16x1xi1>
    %194 = arith.extui %193 : vector<16x1xi1> to vector<16x1xi32>
    %195 = arith.sitofp %194 : vector<16x1xi32> to vector<16x1xf32>
    %c1_72 = arith.constant 1 : index
    %c2_73 = arith.constant 2 : index
    %196 = memref.load %arg1[%c1_72, %c2_73] : memref<2x4xi32, #tpu.memory_space<smem>>
    %c8_i32_74 = arith.constant 8 : i32
    %197 = arith.addi %196, %c8_i32_74 : i32
    %c1_75 = arith.constant 1 : index
    %c3_76 = arith.constant 3 : index
    %198 = memref.load %arg1[%c1_75, %c3_76] : memref<2x4xi32, #tpu.memory_space<smem>>
    %c8_i32_77 = arith.constant 8 : i32
    %199 = arith.addi %198, %c8_i32_77 : i32
    %c1_78 = arith.constant 1 : index
    %c3_79 = arith.constant 3 : index
    %200 = memref.load %arg1[%c1_78, %c3_79] : memref<2x4xi32, #tpu.memory_space<smem>>
    %c1_80 = arith.constant 1 : index
    %c2_81 = arith.constant 2 : index
    %201 = memref.load %arg1[%c1_80, %c2_81] : memref<2x4xi32, #tpu.memory_space<smem>>
    %202 = arith.subi %200, %201 : i32
    %c1_i32_82 = arith.constant 1 : i32
    %203 = arith.maxsi %202, %c1_i32_82 : i32
    %204 = arith.sitofp %203 : i32 to f32
    %cst_83 = arith.constant 1.000000e+00 : f32
    %205 = arith.divf %cst_83, %204 : f32
    %206 = vector.broadcast %197 : i32 to vector<1x16xi32>
    %207 = arith.cmpi sge, %117, %206 : vector<1x16xi32>
    %208 = vector.broadcast %199 : i32 to vector<1x16xi32>
    %209 = arith.cmpi slt, %117, %208 : vector<1x16xi32>
    %210 = arith.andi %207, %209 : vector<1x16xi1>
    %211 = arith.extui %210 : vector<1x16xi1> to vector<1x16xi32>
    %212 = arith.sitofp %211 : vector<1x16xi32> to vector<1x16xf32>
    %213 = vector.broadcast %205 : f32 to vector<1x16xf32>
    %214 = arith.mulf %212, %213 : vector<1x16xf32>
    %215 = vector.broadcast %197 : i32 to vector<16x1xi32>
    %216 = arith.cmpi sge, %116, %215 : vector<16x1xi32>
    %217 = vector.broadcast %199 : i32 to vector<16x1xi32>
    %218 = arith.cmpi slt, %116, %217 : vector<16x1xi32>
    %219 = arith.andi %216, %218 : vector<16x1xi1>
    %220 = arith.extui %219 : vector<16x1xi1> to vector<16x1xi32>
    %221 = arith.sitofp %220 : vector<16x1xi32> to vector<16x1xf32>
    %222 = tpu.concatenate %136, %162, %188, %214 in 0 : vector<1x16xf32>, vector<1x16xf32>, vector<1x16xf32>, vector<1x16xf32> -> vector<4x16xf32>
    %223 = tpu.concatenate %143, %169, %195, %221 in 1 : vector<16x1xf32>, vector<16x1xf32>, vector<16x1xf32>, vector<16x1xf32> -> vector<16x4xf32>
    %c7 = arith.constant 7 : index
    %c0_84 = arith.constant 0 : index
    %224 = vector.load %arg7[%c7, %c0_84] : memref<24x128xf32, #tpu.memory_space<vmem>>, vector<1x32xf32>
    %c8 = arith.constant 8 : index
    %c0_85 = arith.constant 0 : index
    %225 = vector.load %arg7[%c8, %c0_85] : memref<24x128xf32, #tpu.memory_space<vmem>>, vector<1x32xf32>
    %c17 = arith.constant 17 : index
    %c0_86 = arith.constant 0 : index
    %226 = vector.load %arg7[%c17, %c0_86] : memref<24x128xf32, #tpu.memory_space<vmem>>, vector<1x1xf32>
    %c17_87 = arith.constant 17 : index
    %c1_88 = arith.constant 1 : index
    %227 = vector.load %arg7[%c17_87, %c1_88] : memref<24x128xf32, #tpu.memory_space<vmem>>, vector<1x1xf32>
    %c17_89 = arith.constant 17 : index
    %c2_90 = arith.constant 2 : index
    %228 = vector.load %arg7[%c17_89, %c2_90] : memref<24x128xf32, #tpu.memory_space<vmem>>, vector<1x1xf32>
    %cst_91 = arith.constant dense<0.000000e+00> : vector<4x32xf32>
    %229 = tpu.matmul %222, %36, %cst_91 {dimension_numbers = #tpu.dot_dimension_numbers<[1], [0], [0], [1], [0, 0, 1, 1], [], []>} : vector<4x16xf32>, vector<16x32xf32>, vector<4x32xf32> -> vector<4x32xf32>
    %230 = vector.broadcast %224 : vector<1x32xf32> to vector<4x32xf32>
    %231 = arith.mulf %229, %230 : vector<4x32xf32>
    %cst_92 = arith.constant dense<0.000000e+00> : vector<4xf32>
    %232 = vector.multi_reduction <add>, %231, %cst_92 [1] : vector<4x32xf32> to vector<4xf32>
    %233 = vector.shape_cast %232 : vector<4xf32> to vector<4x1xf32>
    %234 = vector.broadcast %225 : vector<1x32xf32> to vector<16x32xf32>
    %235 = arith.mulf %73, %234 : vector<16x32xf32>
    %cst_93 = arith.constant dense<0.000000e+00> : vector<16xf32>
    %236 = vector.multi_reduction <add>, %235, %cst_93 [1] : vector<16x32xf32> to vector<16xf32>
    %237 = vector.shape_cast %236 : vector<16xf32> to vector<16x1xf32>
    %238 = vector.broadcast %225 : vector<1x32xf32> to vector<16x32xf32>
    %239 = arith.mulf %87, %238 : vector<16x32xf32>
    %cst_94 = arith.constant dense<0.000000e+00> : vector<16xf32>
    %240 = vector.multi_reduction <add>, %239, %cst_94 [1] : vector<16x32xf32> to vector<16xf32>
    %241 = vector.shape_cast %240 : vector<16xf32> to vector<16x1xf32>
    %242 = vector.broadcast %225 : vector<1x32xf32> to vector<16x32xf32>
    %243 = arith.mulf %101, %242 : vector<16x32xf32>
    %cst_95 = arith.constant dense<0.000000e+00> : vector<16xf32>
    %244 = vector.multi_reduction <add>, %243, %cst_95 [1] : vector<16x32xf32> to vector<16xf32>
    %245 = vector.shape_cast %244 : vector<16xf32> to vector<16x1xf32>
    %246 = vector.broadcast %225 : vector<1x32xf32> to vector<16x32xf32>
    %247 = arith.mulf %115, %246 : vector<16x32xf32>
    %cst_96 = arith.constant dense<0.000000e+00> : vector<16xf32>
    %248 = vector.multi_reduction <add>, %247, %cst_96 [1] : vector<16x32xf32> to vector<16xf32>
    %249 = vector.shape_cast %248 : vector<16xf32> to vector<16x1xf32>
    %250 = tpu.concatenate %237, %241, %245, %249 in 1 : vector<16x1xf32>, vector<16x1xf32>, vector<16x1xf32>, vector<16x1xf32> -> vector<16x4xf32>
    %cst_97 = arith.constant dense<0.000000e+00> : vector<4x4xf32>
    %251 = tpu.matmul %222, %250, %cst_97 {dimension_numbers = #tpu.dot_dimension_numbers<[1], [0], [0], [1], [0, 0, 1, 1], [], []>} : vector<4x16xf32>, vector<16x4xf32>, vector<4x4xf32> -> vector<4x4xf32>
    %252 = tpu.iota {dimensions = array<i32: 0>} : vector<4x1xi32>
    %c2_i32 = arith.constant 2 : i32
    %c0_i32_98 = arith.constant 0 : i32
    %253 = arith.cmpi eq, %c2_i32, %c0_i32_98 : i32
    %c1_i32_99 = arith.constant 1 : i32
    %254 = arith.select %253, %c1_i32_99, %c2_i32 : i32
    %255 = vector.broadcast %254 : i32 to vector<4x1xi32>
    %256 = arith.remsi %252, %255 : vector<4x1xi32>
    %c0_i32_100 = arith.constant 0 : i32
    %257 = vector.broadcast %c0_i32_100 : i32 to vector<4x1xi32>
    %258 = arith.cmpi ne, %256, %257 : vector<4x1xi32>
    %c0_i32_101 = arith.constant 0 : i32
    %259 = vector.broadcast %c0_i32_101 : i32 to vector<4x1xi32>
    %260 = arith.cmpi slt, %256, %259 : vector<4x1xi32>
    %c0_i32_102 = arith.constant 0 : i32
    %261 = arith.cmpi slt, %254, %c0_i32_102 : i32
    %262 = vector.broadcast %261 : i1 to vector<4x1xi1>
    %263 = vector.broadcast %262 : vector<4x1xi1> to vector<4x1xi1>
    %264 = arith.xori %260, %263 : vector<4x1xi1>
    %265 = arith.andi %264, %258 : vector<4x1xi1>
    %266 = vector.broadcast %254 : i32 to vector<4x1xi32>
    %267 = arith.addi %256, %266 : vector<4x1xi32>
    %268 = arith.select %265, %267, %256 : vector<4x1xi1>, vector<4x1xi32>
    %c0_i32_103 = arith.constant 0 : i32
    %269 = vector.broadcast %c0_i32_103 : i32 to vector<4x1xi32>
    %270 = arith.cmpi eq, %268, %269 : vector<4x1xi32>
    %271 = vector.extract_strided_slice %251 {offsets = [0, 0], sizes = [4, 2], strides = [1, 1]} : vector<4x4xf32> to vector<4x2xf32>
    %272 = vector.extract_strided_slice %251 {offsets = [0, 2], sizes = [4, 2], strides = [1, 1]} : vector<4x4xf32> to vector<4x2xf32>
    %273 = vector.shape_cast %270 : vector<4x1xi1> to vector<4x1xi1>
    %274 = vector.broadcast %273 : vector<4x1xi1> to vector<4x2xi1>
    %275 = arith.select %274, %271, %272 : vector<4x2xi1>, vector<4x2xf32>
    %c0_104 = arith.constant 0 : index
    %c8_105 = arith.constant 8 : index
    %276 = vector.load %arg4[%c0_104, %c8_105] : memref<2x128xf32, #tpu.memory_space<vmem>>, vector<1x2xf32>
    %c0_106 = arith.constant 0 : index
    %c10 = arith.constant 10 : index
    %277 = vector.load %arg4[%c0_106, %c10] : memref<2x128xf32, #tpu.memory_space<vmem>>, vector<1x2xf32>
    %c1_107 = arith.constant 1 : index
    %c8_108 = arith.constant 8 : index
    %278 = vector.load %arg4[%c1_107, %c8_108] : memref<2x128xf32, #tpu.memory_space<vmem>>, vector<1x2xf32>
    %c1_109 = arith.constant 1 : index
    %c10_110 = arith.constant 10 : index
    %279 = vector.load %arg4[%c1_109, %c10_110] : memref<2x128xf32, #tpu.memory_space<vmem>>, vector<1x2xf32>
    %280 = tpu.concatenate %276, %277, %278, %279 in 0 : vector<1x2xf32>, vector<1x2xf32>, vector<1x2xf32>, vector<1x2xf32> -> vector<4x2xf32>
    %281 = vector.broadcast %233 : vector<4x1xf32> to vector<4x2xf32>
    %282 = arith.addf %281, %275 : vector<4x2xf32>
    %283 = vector.broadcast %226 : vector<1x1xf32> to vector<4x2xf32>
    %284 = arith.addf %282, %283 : vector<4x2xf32>
    %cst_111 = arith.constant 0.000000e+00 : f32
    %285 = vector.broadcast %cst_111 : f32 to vector<4x2xf32>
    %286 = arith.cmpf oge, %284, %285 : vector<4x2xf32>
    %cst_112 = arith.constant 0.00999999977 : f32
    %287 = vector.broadcast %cst_112 : f32 to vector<4x2xf32>
    %288 = arith.mulf %287, %284 : vector<4x2xf32>
    %289 = arith.select %286, %284, %288 : vector<4x2xi1>, vector<4x2xf32>
    %290 = vector.broadcast %227 : vector<1x1xf32> to vector<4x2xf32>
    %291 = arith.mulf %290, %280 : vector<4x2xf32>
    %292 = arith.addf %289, %291 : vector<4x2xf32>
    %293 = vector.broadcast %228 : vector<1x1xf32> to vector<4x2xf32>
    %294 = arith.addf %292, %293 : vector<4x2xf32>
    %cst_113 = arith.constant dense<0xFF800000> : vector<4xf32>
    %295 = vector.multi_reduction <maximumf>, %294, %cst_113 [1] : vector<4x2xf32> to vector<4xf32>
    %296 = vector.shape_cast %295 : vector<4xf32> to vector<4x1xf32>
    %297 = vector.broadcast %296 : vector<4x1xf32> to vector<4x2xf32>
    %298 = arith.subf %294, %297 : vector<4x2xf32>
    %299 = math.exp %298 : vector<4x2xf32>
    %cst_114 = arith.constant dense<0.000000e+00> : vector<4xf32>
    %300 = vector.multi_reduction <add>, %299, %cst_114 [1] : vector<4x2xf32> to vector<4xf32>
    %301 = vector.shape_cast %300 : vector<4xf32> to vector<4x1xf32>
    %302 = tpu.reciprocal %301 {approx = true} : vector<4x1xf32> -> vector<4x1xf32>
    %303 = vector.broadcast %302 : vector<4x1xf32> to vector<4x2xf32>
    %304 = arith.mulf %299, %303 : vector<4x2xf32>
    %cst_115 = arith.constant 0.000000e+00 : f32
    %305 = vector.broadcast %cst_115 : f32 to vector<4x2xf32>
    %c0_i32_116 = arith.constant 0 : i32
    %306 = vector.broadcast %c0_i32_116 : i32 to vector<4x1xi32>
    %307 = arith.cmpi eq, %268, %306 : vector<4x1xi32>
    %308 = tpu.concatenate %304, %305 in 1 : vector<4x2xf32>, vector<4x2xf32> -> vector<4x4xf32>
    %309 = tpu.concatenate %305, %304 in 1 : vector<4x2xf32>, vector<4x2xf32> -> vector<4x4xf32>
    %310 = vector.shape_cast %307 : vector<4x1xi1> to vector<4x1xi1>
    %311 = vector.broadcast %310 : vector<4x1xi1> to vector<4x4xi1>
    %312 = arith.select %311, %308, %309 : vector<4x4xi1>, vector<4x4xf32>
    %cst_117 = arith.constant dense<0.000000e+00> : vector<16x4xf32>
    %313 = tpu.matmul %223, %312, %cst_117 {dimension_numbers = #tpu.dot_dimension_numbers<[1], [0], [0], [1], [0, 0, 1, 1], [], []>} : vector<16x4xf32>, vector<4x4xf32>, vector<16x4xf32> -> vector<16x4xf32>
    %314 = vector.extract_strided_slice %313 {offsets = [0, 0], sizes = [16, 1], strides = [1, 1]} : vector<16x4xf32> to vector<16x1xf32>
    %315 = vector.broadcast %314 : vector<16x1xf32> to vector<16x32xf32>
    %316 = arith.mulf %315, %73 : vector<16x32xf32>
    %317 = arith.addf %36, %316 : vector<16x32xf32>
    %318 = vector.extract_strided_slice %313 {offsets = [0, 1], sizes = [16, 1], strides = [1, 1]} : vector<16x4xf32> to vector<16x1xf32>
    %319 = vector.broadcast %318 : vector<16x1xf32> to vector<16x32xf32>
    %320 = arith.mulf %319, %87 : vector<16x32xf32>
    %321 = arith.addf %317, %320 : vector<16x32xf32>
    %322 = vector.extract_strided_slice %313 {offsets = [0, 2], sizes = [16, 1], strides = [1, 1]} : vector<16x4xf32> to vector<16x1xf32>
    %323 = vector.broadcast %322 : vector<16x1xf32> to vector<16x32xf32>
    %324 = arith.mulf %323, %101 : vector<16x32xf32>
    %325 = arith.addf %321, %324 : vector<16x32xf32>
    %326 = vector.extract_strided_slice %313 {offsets = [0, 3], sizes = [16, 1], strides = [1, 1]} : vector<16x4xf32> to vector<16x1xf32>
    %327 = vector.broadcast %326 : vector<16x1xf32> to vector<16x32xf32>
    %328 = arith.mulf %327, %115 : vector<16x32xf32>
    %329 = arith.addf %325, %328 : vector<16x32xf32>
    %c0_118 = arith.constant 0 : index
    %c512_119 = arith.constant 512 : index
    %330 = vector.load %arg6[%c0_118, %c512_119] : memref<32x1280xf32, #tpu.memory_space<vmem>>, vector<32x384xf32>
    %cst_120 = arith.constant dense<0.000000e+00> : vector<16x384xf32>
    %331 = tpu.matmul %329, %330, %cst_120 {dimension_numbers = #tpu.dot_dimension_numbers<[1], [0], [0], [1], [0, 0, 1, 1], [], []>} : vector<16x32xf32>, vector<32x384xf32>, vector<16x384xf32> -> vector<16x384xf32>
    %332 = vector.extract_strided_slice %331 {offsets = [0, 0], sizes = [16, 16], strides = [1, 1]} : vector<16x384xf32> to vector<16x16xf32>
    %c4_121 = arith.constant 4 : index
    %c0_122 = arith.constant 0 : index
    %333 = vector.load %arg7[%c4_121, %c0_122] : memref<24x128xf32, #tpu.memory_space<vmem>>, vector<1x16xf32>
    %334 = vector.broadcast %333 : vector<1x16xf32> to vector<16x16xf32>
    %335 = arith.addf %332, %334 : vector<16x16xf32>
    %336 = vector.shape_cast %335 : vector<16x16xf32> to vector<2x8x16xf32>
    %337 = vector.extract_strided_slice %331 {offsets = [0, 128], sizes = [16, 16], strides = [1, 1]} : vector<16x384xf32> to vector<16x16xf32>
    %c5_123 = arith.constant 5 : index
    %c0_124 = arith.constant 0 : index
    %338 = vector.load %arg7[%c5_123, %c0_124] : memref<24x128xf32, #tpu.memory_space<vmem>>, vector<1x16xf32>
    %339 = vector.broadcast %338 : vector<1x16xf32> to vector<16x16xf32>
    %340 = arith.addf %337, %339 : vector<16x16xf32>
    %341 = vector.shape_cast %340 : vector<16x16xf32> to vector<2x8x16xf32>
    %342 = vector.extract_strided_slice %331 {offsets = [0, 256], sizes = [16, 32], strides = [1, 1]} : vector<16x384xf32> to vector<16x32xf32>
    %c6 = arith.constant 6 : index
    %c0_125 = arith.constant 0 : index
    %343 = vector.load %arg7[%c6, %c0_125] : memref<24x128xf32, #tpu.memory_space<vmem>>, vector<1x32xf32>
    %344 = vector.broadcast %343 : vector<1x32xf32> to vector<16x32xf32>
    %345 = arith.addf %342, %344 : vector<16x32xf32>
    %346 = vector.shape_cast %345 : vector<16x32xf32> to vector<2x8x32xf32>
    "tpu.trace_start"() <{level = 10 : i32, message = "bqe,bke->bqk"}> : () -> ()
    %cst_126 = arith.constant dense<0.000000e+00> : vector<2x8x8xf32>
    %347 = tpu.matmul %336, %341, %cst_126 {dimension_numbers = #tpu.dot_dimension_numbers<[2], [2], [1], [1], [0, 0, 0, 1, 1, 1], [0], [0]>} : vector<2x8x16xf32>, vector<2x8x16xf32>, vector<2x8x8xf32> -> vector<2x8x8xf32>
    "tpu.trace_stop"() : () -> ()
    %cst_127 = arith.constant 2.500000e-01 : f32
    %348 = vector.broadcast %cst_127 : f32 to vector<2x8x8xf32>
    %349 = arith.mulf %347, %348 : vector<2x8x8xf32>
    %cst_128 = arith.constant dense<0xFF800000> : vector<2x8xf32>
    %350 = vector.multi_reduction <maximumf>, %349, %cst_128 [2] : vector<2x8x8xf32> to vector<2x8xf32>
    %351 = vector.shape_cast %350 : vector<2x8xf32> to vector<2x8x1xf32>
    %352 = vector.broadcast %351 : vector<2x8x1xf32> to vector<2x8x8xf32>
    %353 = arith.subf %349, %352 : vector<2x8x8xf32>
    %354 = math.exp %353 : vector<2x8x8xf32>
    %cst_129 = arith.constant dense<0.000000e+00> : vector<2x8xf32>
    %355 = vector.multi_reduction <add>, %354, %cst_129 [2] : vector<2x8x8xf32> to vector<2x8xf32>
    %356 = vector.shape_cast %355 : vector<2x8xf32> to vector<2x8x1xf32>
    %357 = tpu.reciprocal %356 {approx = true} : vector<2x8x1xf32> -> vector<2x8x1xf32>
    %358 = vector.broadcast %357 : vector<2x8x1xf32> to vector<2x8x8xf32>
    %359 = arith.mulf %354, %358 : vector<2x8x8xf32>
    "tpu.trace_start"() <{level = 10 : i32, message = "bqk,bkd->bqd"}> : () -> ()
    %cst_130 = arith.constant dense<0.000000e+00> : vector<2x8x32xf32>
    %360 = tpu.matmul %359, %346, %cst_130 {dimension_numbers = #tpu.dot_dimension_numbers<[2], [1], [1], [2], [0, 0, 0, 1, 1, 2], [0], [0]>} : vector<2x8x8xf32>, vector<2x8x32xf32>, vector<2x8x32xf32> -> vector<2x8x32xf32>
    "tpu.trace_stop"() : () -> ()
    %361 = vector.shape_cast %360 : vector<2x8x32xf32> to vector<16x32xf32>
    %c0_131 = arith.constant 0 : index
    %362 = memref.load %arg2[%c0_131] : memref<8xi32, #tpu.memory_space<smem>>
    %363 = vector.broadcast %362 : i32 to vector<1x16xi32>
    %364 = arith.cmpi eq, %117, %363 : vector<1x16xi32>
    %365 = arith.extui %364 : vector<1x16xi1> to vector<1x16xi32>
    %366 = arith.sitofp %365 : vector<1x16xi32> to vector<1x16xf32>
    %c1_132 = arith.constant 1 : index
    %367 = memref.load %arg2[%c1_132] : memref<8xi32, #tpu.memory_space<smem>>
    %368 = vector.broadcast %367 : i32 to vector<1x16xi32>
    %369 = arith.cmpi eq, %117, %368 : vector<1x16xi32>
    %370 = arith.extui %369 : vector<1x16xi1> to vector<1x16xi32>
    %371 = arith.sitofp %370 : vector<1x16xi32> to vector<1x16xf32>
    %c2_133 = arith.constant 2 : index
    %372 = memref.load %arg2[%c2_133] : memref<8xi32, #tpu.memory_space<smem>>
    %373 = vector.broadcast %372 : i32 to vector<1x16xi32>
    %374 = arith.cmpi eq, %117, %373 : vector<1x16xi32>
    %375 = arith.extui %374 : vector<1x16xi1> to vector<1x16xi32>
    %376 = arith.sitofp %375 : vector<1x16xi32> to vector<1x16xf32>
    %c3_134 = arith.constant 3 : index
    %377 = memref.load %arg2[%c3_134] : memref<8xi32, #tpu.memory_space<smem>>
    %378 = vector.broadcast %377 : i32 to vector<1x16xi32>
    %379 = arith.cmpi eq, %117, %378 : vector<1x16xi32>
    %380 = arith.extui %379 : vector<1x16xi1> to vector<1x16xi32>
    %381 = arith.sitofp %380 : vector<1x16xi32> to vector<1x16xf32>
    %c4_135 = arith.constant 4 : index
    %382 = memref.load %arg2[%c4_135] : memref<8xi32, #tpu.memory_space<smem>>
    %383 = vector.broadcast %382 : i32 to vector<1x16xi32>
    %384 = arith.cmpi eq, %117, %383 : vector<1x16xi32>
    %385 = arith.extui %384 : vector<1x16xi1> to vector<1x16xi32>
    %386 = arith.sitofp %385 : vector<1x16xi32> to vector<1x16xf32>
    %c5_136 = arith.constant 5 : index
    %387 = memref.load %arg2[%c5_136] : memref<8xi32, #tpu.memory_space<smem>>
    %388 = vector.broadcast %387 : i32 to vector<1x16xi32>
    %389 = arith.cmpi eq, %117, %388 : vector<1x16xi32>
    %390 = arith.extui %389 : vector<1x16xi1> to vector<1x16xi32>
    %391 = arith.sitofp %390 : vector<1x16xi32> to vector<1x16xf32>
    %c6_137 = arith.constant 6 : index
    %392 = memref.load %arg2[%c6_137] : memref<8xi32, #tpu.memory_space<smem>>
    %393 = vector.broadcast %392 : i32 to vector<1x16xi32>
    %394 = arith.cmpi eq, %117, %393 : vector<1x16xi32>
    %395 = arith.extui %394 : vector<1x16xi1> to vector<1x16xi32>
    %396 = arith.sitofp %395 : vector<1x16xi32> to vector<1x16xf32>
    %c7_138 = arith.constant 7 : index
    %397 = memref.load %arg2[%c7_138] : memref<8xi32, #tpu.memory_space<smem>>
    %398 = vector.broadcast %397 : i32 to vector<1x16xi32>
    %399 = arith.cmpi eq, %117, %398 : vector<1x16xi32>
    %400 = arith.extui %399 : vector<1x16xi1> to vector<1x16xi32>
    %401 = arith.sitofp %400 : vector<1x16xi32> to vector<1x16xf32>
    %402 = tpu.concatenate %366, %371, %376, %381, %386, %391, %396, %401 in 0 : vector<1x16xf32>, vector<1x16xf32>, vector<1x16xf32>, vector<1x16xf32>, vector<1x16xf32>, vector<1x16xf32>, vector<1x16xf32>, vector<1x16xf32> -> vector<8x16xf32>
    %cst_139 = arith.constant dense<0.000000e+00> : vector<8x32xf32>
    %403 = tpu.matmul %402, %361, %cst_139 {dimension_numbers = #tpu.dot_dimension_numbers<[1], [0], [0], [1], [0, 0, 1, 1], [], []>} : vector<8x16xf32>, vector<16x32xf32>, vector<8x32xf32> -> vector<8x32xf32>
    %c0_140 = arith.constant 0 : index
    %c1024 = arith.constant 1024 : index
    %404 = vector.load %arg6[%c0_140, %c1024] : memref<32x1280xf32, #tpu.memory_space<vmem>>, vector<32x32xf32>
    %cst_141 = arith.constant dense<0.000000e+00> : vector<8x32xf32>
    %405 = tpu.matmul %403, %404, %cst_141 {dimension_numbers = #tpu.dot_dimension_numbers<[1], [0], [0], [1], [0, 0, 1, 1], [], []>} : vector<8x32xf32>, vector<32x32xf32>, vector<8x32xf32> -> vector<8x32xf32>
    %c13 = arith.constant 13 : index
    %c0_142 = arith.constant 0 : index
    %406 = vector.load %arg7[%c13, %c0_142] : memref<24x128xf32, #tpu.memory_space<vmem>>, vector<1x32xf32>
    %407 = vector.broadcast %406 : vector<1x32xf32> to vector<8x32xf32>
    %408 = arith.addf %405, %407 : vector<8x32xf32>
    %cst_143 = arith.constant 5.000000e-01 : f32
    %409 = vector.broadcast %cst_143 : f32 to vector<8x32xf32>
    %410 = arith.mulf %409, %408 : vector<8x32xf32>
    %cst_144 = arith.constant 4.471500e-02 : f32
    %411 = vector.broadcast %cst_144 : f32 to vector<8x32xf32>
    %412 = arith.mulf %411, %408 : vector<8x32xf32>
    %413 = arith.mulf %412, %408 : vector<8x32xf32>
    %414 = arith.mulf %413, %408 : vector<8x32xf32>
    %415 = arith.addf %408, %414 : vector<8x32xf32>
    %cst_145 = arith.constant 0.797884583 : f32
    %416 = vector.broadcast %cst_145 : f32 to vector<8x32xf32>
    %417 = arith.mulf %416, %415 : vector<8x32xf32>
    %418 = math.tanh %417 : vector<8x32xf32>
    %cst_146 = arith.constant 1.000000e+00 : f32
    %419 = vector.broadcast %cst_146 : f32 to vector<8x32xf32>
    %420 = arith.addf %419, %418 : vector<8x32xf32>
    %421 = arith.mulf %410, %420 : vector<8x32xf32>
    %cst_147 = arith.constant dense<0.000000e+00> : vector<8xf32>
    %422 = vector.multi_reduction <add>, %421, %cst_147 [1] : vector<8x32xf32> to vector<8xf32>
    %423 = vector.shape_cast %422 : vector<8xf32> to vector<8x1xf32>
    %cst_148 = arith.constant 3.200000e+01 : f32
    %424 = vector.broadcast %cst_148 : f32 to vector<8x1xf32>
    %425 = arith.divf %423, %424 : vector<8x1xf32>
    %426 = vector.broadcast %425 : vector<8x1xf32> to vector<8x32xf32>
    %427 = arith.subf %421, %426 : vector<8x32xf32>
    %428 = arith.mulf %427, %427 : vector<8x32xf32>
    %cst_149 = arith.constant dense<0.000000e+00> : vector<8xf32>
    %429 = vector.multi_reduction <add>, %428, %cst_149 [1] : vector<8x32xf32> to vector<8xf32>
    %430 = vector.shape_cast %429 : vector<8xf32> to vector<8x1xf32>
    %cst_150 = arith.constant 3.200000e+01 : f32
    %431 = vector.broadcast %cst_150 : f32 to vector<8x1xf32>
    %432 = arith.divf %430, %431 : vector<8x1xf32>
    %433 = vector.broadcast %425 : vector<8x1xf32> to vector<8x32xf32>
    %434 = arith.subf %421, %433 : vector<8x32xf32>
    %cst_151 = arith.constant 9.99999996E-13 : f32
    %435 = vector.broadcast %cst_151 : f32 to vector<8x1xf32>
    %436 = arith.addf %432, %435 : vector<8x1xf32>
    %437 = math.rsqrt %436 : vector<8x1xf32>
    %438 = vector.broadcast %437 : vector<8x1xf32> to vector<8x32xf32>
    %439 = arith.mulf %434, %438 : vector<8x32xf32>
    %c14 = arith.constant 14 : index
    %c0_152 = arith.constant 0 : index
    %440 = vector.load %arg7[%c14, %c0_152] : memref<24x128xf32, #tpu.memory_space<vmem>>, vector<1x32xf32>
    %441 = vector.broadcast %440 : vector<1x32xf32> to vector<8x32xf32>
    %442 = arith.mulf %439, %441 : vector<8x32xf32>
    %c15 = arith.constant 15 : index
    %c0_153 = arith.constant 0 : index
    %443 = vector.load %arg7[%c15, %c0_153] : memref<24x128xf32, #tpu.memory_space<vmem>>, vector<1x32xf32>
    %444 = vector.broadcast %443 : vector<1x32xf32> to vector<8x32xf32>
    %445 = arith.addf %442, %444 : vector<8x32xf32>
    %c0_154 = arith.constant 0 : index
    %c1152 = arith.constant 1152 : index
    %446 = vector.load %arg6[%c0_154, %c1152] : memref<32x1280xf32, #tpu.memory_space<vmem>>, vector<32x128xf32>
    %cst_155 = arith.constant dense<0.000000e+00> : vector<8x128xf32>
    %447 = tpu.matmul %445, %446, %cst_155 {dimension_numbers = #tpu.dot_dimension_numbers<[1], [0], [0], [1], [0, 0, 1, 1], [], []>} : vector<8x32xf32>, vector<32x128xf32>, vector<8x128xf32> -> vector<8x128xf32>
    %c16 = arith.constant 16 : index
    %c0_156 = arith.constant 0 : index
    %448 = vector.load %arg7[%c16, %c0_156] : memref<24x128xf32, #tpu.memory_space<vmem>>, vector<1x128xf32>
    %449 = vector.broadcast %448 : vector<1x128xf32> to vector<8x128xf32>
    %450 = arith.addf %447, %449 : vector<8x128xf32>
    %451 = vector.extract_strided_slice %360 {offsets = [0, 0, 0], sizes = [2, 1, 32], strides = [1, 1, 1]} : vector<2x8x32xf32> to vector<2x1x32xf32>
    %452 = vector.shape_cast %451 : vector<2x1x32xf32> to vector<2x32xf32>
    %c0_157 = arith.constant 0 : index
    %c896 = arith.constant 896 : index
    %453 = vector.load %arg6[%c0_157, %c896] : memref<32x1280xf32, #tpu.memory_space<vmem>>, vector<32x16xf32>
    %cst_158 = arith.constant dense<0.000000e+00> : vector<2x16xf32>
    %454 = tpu.matmul %452, %453, %cst_158 {dimension_numbers = #tpu.dot_dimension_numbers<[1], [0], [0], [1], [0, 0, 1, 1], [], []>} : vector<2x32xf32>, vector<32x16xf32>, vector<2x16xf32> -> vector<2x16xf32>
    %c9 = arith.constant 9 : index
    %c0_159 = arith.constant 0 : index
    %455 = vector.load %arg7[%c9, %c0_159] : memref<24x128xf32, #tpu.memory_space<vmem>>, vector<1x16xf32>
    %456 = vector.broadcast %455 : vector<1x16xf32> to vector<2x16xf32>
    %457 = arith.addf %454, %456 : vector<2x16xf32>
    %cst_160 = arith.constant 5.000000e-01 : f32
    %458 = vector.broadcast %cst_160 : f32 to vector<2x16xf32>
    %459 = arith.mulf %458, %457 : vector<2x16xf32>
    %cst_161 = arith.constant 4.471500e-02 : f32
    %460 = vector.broadcast %cst_161 : f32 to vector<2x16xf32>
    %461 = arith.mulf %460, %457 : vector<2x16xf32>
    %462 = arith.mulf %461, %457 : vector<2x16xf32>
    %463 = arith.mulf %462, %457 : vector<2x16xf32>
    %464 = arith.addf %457, %463 : vector<2x16xf32>
    %cst_162 = arith.constant 0.797884583 : f32
    %465 = vector.broadcast %cst_162 : f32 to vector<2x16xf32>
    %466 = arith.mulf %465, %464 : vector<2x16xf32>
    %467 = math.tanh %466 : vector<2x16xf32>
    %cst_163 = arith.constant 1.000000e+00 : f32
    %468 = vector.broadcast %cst_163 : f32 to vector<2x16xf32>
    %469 = arith.addf %468, %467 : vector<2x16xf32>
    %470 = arith.mulf %459, %469 : vector<2x16xf32>
    %c10_164 = arith.constant 10 : index
    %c0_165 = arith.constant 0 : index
    %471 = vector.load %arg7[%c10_164, %c0_165] : memref<24x128xf32, #tpu.memory_space<vmem>>, vector<1x16xf32>
    %472 = vector.broadcast %471 : vector<1x16xf32> to vector<2x16xf32>
    %473 = arith.mulf %470, %472 : vector<2x16xf32>
    %cst_166 = arith.constant dense<0.000000e+00> : vector<2xf32>
    %474 = vector.multi_reduction <add>, %473, %cst_166 [1] : vector<2x16xf32> to vector<2xf32>
    %475 = vector.shape_cast %474 : vector<2xf32> to vector<2x1xf32>
    %c11 = arith.constant 11 : index
    %c0_167 = arith.constant 0 : index
    %476 = vector.load %arg7[%c11, %c0_167] : memref<24x128xf32, #tpu.memory_space<vmem>>, vector<1x16xf32>
    %477 = vector.broadcast %476 : vector<1x16xf32> to vector<2x16xf32>
    %478 = arith.mulf %470, %477 : vector<2x16xf32>
    %cst_168 = arith.constant dense<0.000000e+00> : vector<2xf32>
    %479 = vector.multi_reduction <add>, %478, %cst_168 [1] : vector<2x16xf32> to vector<2xf32>
    %480 = vector.shape_cast %479 : vector<2xf32> to vector<2x1xf32>
    %481 = tpu.concatenate %475, %480 in 1 : vector<2x1xf32>, vector<2x1xf32> -> vector<2x2xf32>
    %c12 = arith.constant 12 : index
    %c0_169 = arith.constant 0 : index
    %482 = vector.load %arg7[%c12, %c0_169] : memref<24x128xf32, #tpu.memory_space<vmem>>, vector<1x2xf32>
    %483 = vector.broadcast %482 : vector<1x2xf32> to vector<2x2xf32>
    %484 = arith.addf %481, %483 : vector<2x2xf32>
    %cst_170 = arith.constant dense<0xFF800000> : vector<2xf32>
    %485 = vector.multi_reduction <maximumf>, %484, %cst_170 [1] : vector<2x2xf32> to vector<2xf32>
    %486 = vector.shape_cast %485 : vector<2xf32> to vector<2x1xf32>
    %487 = vector.broadcast %486 : vector<2x1xf32> to vector<2x2xf32>
    %488 = arith.subf %484, %487 : vector<2x2xf32>
    %489 = math.exp %488 : vector<2x2xf32>
    %cst_171 = arith.constant dense<0.000000e+00> : vector<2xf32>
    %490 = vector.multi_reduction <add>, %489, %cst_171 [1] : vector<2x2xf32> to vector<2xf32>
    %491 = vector.shape_cast %490 : vector<2xf32> to vector<2x1xf32>
    %492 = math.log %491 : vector<2x1xf32>
    %493 = vector.broadcast %492 : vector<2x1xf32> to vector<2x2xf32>
    %494 = arith.subf %488, %493 : vector<2x2xf32>
    %cst_172 = arith.constant 0.000000e+00 : f32
    %495 = vector.broadcast %cst_172 : f32 to vector<2x126xf32>
    %496 = tpu.concatenate %494, %495 in 1 : vector<2x2xf32>, vector<2x126xf32> -> vector<2x128xf32>
    %cst_173 = arith.constant 0.000000e+00 : f32
    %497 = vector.broadcast %cst_173 : f32 to vector<6x128xf32>
    %498 = tpu.concatenate %496, %497 in 0 : vector<2x128xf32>, vector<6x128xf32> -> vector<8x128xf32>
    %499 = tpu.concatenate %450, %498 in 0 : vector<8x128xf32>, vector<8x128xf32> -> vector<16x128xf32>
    %c0_174 = arith.constant 0 : index
    %c0_175 = arith.constant 0 : index
    %500 = vector.load %arg8[%c0_174, %c0_175] : memref<16x128xf32, #tpu.memory_space<vmem>>, vector<16x128xf32>
    tpu.vector_store %arg8[%c0_174, %c0_175], %499 {strides = array<i32>} : memref<16x128xf32, #tpu.memory_space<vmem>>, vector<16x128xf32>,
    return
  }
  func.func @transform_0(%arg0: i32, %arg1: memref<2x4xi32, #tpu.memory_space<smem>>, %arg2: memref<8xi32, #tpu.memory_space<smem>>) -> (i32, i32) {
    %c0_i32 = arith.constant 0 : i32
    %c0_i32_0 = arith.constant 0 : i32
    %c0_i32_1 = arith.constant 0 : i32
    return %c0_i32, %c0_i32_0 : i32, i32
  }
  func.func @transform_1(%arg0: i32, %arg1: memref<2x4xi32, #tpu.memory_space<smem>>, %arg2: memref<8xi32, #tpu.memory_space<smem>>) -> (i32, i32) {
    %c0_i32 = arith.constant 0 : i32
    %c0_i32_0 = arith.constant 0 : i32
    %c0_i32_1 = arith.constant 0 : i32
    return %c0_i32, %c0_i32_0 : i32, i32
  }
  func.func @transform_2(%arg0: i32, %arg1: memref<2x4xi32, #tpu.memory_space<smem>>, %arg2: memref<8xi32, #tpu.memory_space<smem>>) -> (i32, i32) {
    %c0_i32 = arith.constant 0 : i32
    %c0_i32_0 = arith.constant 0 : i32
    %c0_i32_1 = arith.constant 0 : i32
    return %c0_i32, %c0_i32_0 : i32, i32
  }
  func.func @transform_3(%arg0: i32, %arg1: memref<2x4xi32, #tpu.memory_space<smem>>, %arg2: memref<8xi32, #tpu.memory_space<smem>>) -> (i32, i32) {
    %c0_i32 = arith.constant 0 : i32
    %c0_i32_0 = arith.constant 0 : i32
    %c0_i32_1 = arith.constant 0 : i32
    return %c0_i32, %c0_i32_0 : i32, i32
  }
  func.func @transform_4(%arg0: i32, %arg1: memref<2x4xi32, #tpu.memory_space<smem>>, %arg2: memref<8xi32, #tpu.memory_space<smem>>) -> (i32, i32) {
    %c0_i32 = arith.constant 0 : i32
    %c0_i32_0 = arith.constant 0 : i32
    %c0_i32_1 = arith.constant 0 : i32
    return %c0_i32, %c0_i32_0 : i32, i32
  }
  func.func @transform_5(%arg0: i32, %arg1: memref<2x4xi32, #tpu.memory_space<smem>>, %arg2: memref<8xi32, #tpu.memory_space<smem>>) -> (i32, i32) {
    %c0_i32 = arith.constant 0 : i32
    %c0_i32_0 = arith.constant 0 : i32
    %c0_i32_1 = arith.constant 0 : i32
    return %c0_i32, %c0_i32_0 : i32, i32
  }
}

</mosaic_0001>

<llo_original>
// kernel: tpu_custom_call.1
$region0: #{tpu_custom_call.1}
  #allocation0 [shape = 'u32[]', space=smem, size = 0x4, offset = 0x4, fixed_abs, tag = 'smem constant byte address 0x4 - core index']
  #allocation1 [shape = 'u32[72,128]{1,0:T(1,128)}', space=vmem, size = 0x9000, scoped, tag = 'internal scratch']
  #allocation2 [shape = 's32[1]{0}', space=sflag, size = 0x4, scoped, tag = 'scoped memory for tpu_custom_call.1']
  #allocation3 [shape = 'u8[1024]{0}', space=smem, size = 0x400, scoped, tag = 'prefetched SMEM operand 0']
  #allocation4 [shape = 'u8[512]{0}', space=smem, size = 0x200, scoped, tag = 'prefetched SMEM operand 1']
  %s0 = inlined_call_operand.vmem [shape: s32[2,4], index: 0, kind: input, shape index: {}]
  %s1 = inlined_call_operand.vmem [shape: s32[8], index: 1, kind: input, shape index: {}]
  %s2 = inlined_call_operand.vmem [shape: f32[16,32], index: 2, kind: input, shape index: {}]
  %s3 = inlined_call_operand.vmem [shape: f32[2,128], index: 3, kind: input, shape index: {}]
  %s4 = inlined_call_operand.vmem [shape: f32[64,32], index: 4, kind: input, shape index: {}]
  %s5 = inlined_call_operand.hbm [shape: f32[32,1280], index: 5, kind: input, shape index: {}]
  %s6 = inlined_call_operand.vmem [shape: f32[24,128], index: 6, kind: input, shape index: {}]
  %s7 = inlined_call_operand.hbm [shape: f32[16,128], index: 7, kind: output, shape index: {}]
  %s8 = sld [smem:[#allocation0]]
  $region34: #{tpu_custom_call.1} parent=0
    _
  %s10 = ssub.s32 1, %s8
  %s11 = scalar_select 0, %s10, %s8
  %s13 = sshll.u32 %s0, 4
  %s14 = int_to_ptr.vmem [resolvable:$true] %s13
  %16 = dma.vmem_to_smem %s14, 32, [#allocation3], [#allocation2]
  %s18 = sshll.u32 %s1, 4
  %s19 = int_to_ptr.vmem [resolvable:$true] %s18
  %21 = dma.vmem_to_smem %s19, 16, [#allocation4], [#allocation2]
  %23 = dma.done [#allocation2], 48
  %24 = sfence
  $region1: #{tpu_custom_call.1} parent=0
    #allocation5 [shape = 'u8[163840]{0}', space=vmem, size = 0x28000, scoped, tag = 'input window, operand 5, single buffered']
    #allocation6 [shape = 's32[1]{0}', space=sflag, size = 0x4, scoped, tag = 'scoped memory for tpu_custom_call.1']
    #allocation7 [shape = 's32[1]{0}', space=sflag, size = 0x4, scoped, tag = 'scoped memory for tpu_custom_call.1']
    #allocation8 [shape = 'u8[8192]{0}', space=vmem, size = 0x2000, scoped, tag = 'output window, operand 0, single buffered']
    %25 = vsyncpa [#allocation6], 0
    %26 = vsyncpa [#allocation7], 0
    // Predicated region
    $region2: #{tpu_custom_call.1} parent=1 // pred_check
      _
    $region3: #{tpu_custom_call.1} parent=1 // pred_check_branch
      %28 = sbr.rel (0) target = $region5
    $region4: #{tpu_custom_call.1} parent=1 // pred_region
      _
    $region5: #{tpu_custom_call.1} parent=1 // pred_fallthru
      _
    // Predicated region
    $region6: #{tpu_custom_call.1} parent=1 // pred_check
      _
    $region7: #{tpu_custom_call.1} parent=1 // pred_check_branch
      %30 = sbr.rel (0) target = $region9
    $region8: #{tpu_custom_call.1} parent=1 // pred_region
      _
    $region9: #{tpu_custom_call.1} parent=1 // pred_fallthru
      _
    // Predicated region
    $region10: #{tpu_custom_call.1} parent=1 // pred_check
      _
    $region11: #{tpu_custom_call.1} parent=1 // pred_check_branch
      %32 = sbr.rel (0) target = $region13
    $region12: #{tpu_custom_call.1} parent=1 // pred_region
      _
    $region13: #{tpu_custom_call.1} parent=1 // pred_fallthru
      _
    // Predicated region
    $region14: #{tpu_custom_call.1} parent=1 // pred_check
      _
    $region15: #{tpu_custom_call.1} parent=1 // pred_check_branch
      %34 = sbr.rel (0) target = $region17
    $region16: #{tpu_custom_call.1} parent=1 // pred_region
      %36 = vsyncadd [#allocation6], 0
      %s37 = sshll.u32 %s5, 4
      %s38 = int_to_ptr.hbm [resolvable:$true] %s37
      %s39 = sshll.u32 [#allocation5], 4
      %s40 = int_to_ptr.vmem [resolvable:$true] %s39
      %45 = dma.hbm_to_vmem [thread:$0]  %s38, 5120, %s40, [#allocation6], 1280, 1280, 80
    $region17: #{tpu_custom_call.1} parent=1 // pred_fallthru
      _
    // Predicated region
    $region18: #{tpu_custom_call.1} parent=1 // pred_check
      _
    $region19: #{tpu_custom_call.1} parent=1 // pred_check_branch
      %47 = sbr.rel (0) target = $region21
    $region20: #{tpu_custom_call.1} parent=1 // pred_region
      _
    $region21: #{tpu_custom_call.1} parent=1 // pred_fallthru
      _
    // Predicated region
    $region22: #{tpu_custom_call.1} parent=1 // pred_check
      _
    $region23: #{tpu_custom_call.1} parent=1 // pred_check_branch
      %49 = sbr.rel (0) target = $region25
    $region24: #{tpu_custom_call.1} parent=1 // pred_region
      %51 = dma.done [#allocation6], 5120
    $region25: #{tpu_custom_call.1} parent=1 // pred_fallthru
      _
    %v52 = vld [vmem:[%s2] sm:$0xff]
    %v53 = vld [vmem:[%s2 + $0x8] sm:$0xff]
    %v54 = vld [vmem:[#allocation5] sm:$0xff]
    %v55 = vld [vmem:[#allocation5 + $0x8] sm:$0xff]
    %v56 = vld [vmem:[#allocation5 + $0x10] sm:$0xff]
    %v57 = vld [vmem:[#allocation5 + $0x50] sm:$0xff]
    %v58 = vld [vmem:[#allocation5 + $0x58] sm:$0xff]
    %v59 = vld [vmem:[#allocation5 + $0x60] sm:$0xff]
    %v60 = vld [vmem:[#allocation5 + $0xa0] sm:$0xff]
    %v61 = vld [vmem:[#allocation5 + $0xa8] sm:$0xff]
    %v62 = vld [vmem:[#allocation5 + $0xb0] sm:$0xff]
    %v63 = vld [vmem:[#allocation5 + $0xf0] sm:$0xff]
    %v64 = vld [vmem:[#allocation5 + $0xf8] sm:$0xff]
    %v65 = vld [vmem:[#allocation5 + $0x100] sm:$0xff]
    %vm66 = vcmask 261120
    %v68 = vsel %vm66, %v52, 0
    %v71 = vsel %vm66, %v53, 0
    %73 = vmatpush.msra.mxu0 0.0
    %74 = vmatpush.msra.mxu0 0.0
    %75 = vmatpush.msra.mxu0 0.0
    %76 = vmatpush.msra.mxu0 0.0
    %77 = vmatpush.msra.mxu0 0.0
    %78 = vmatpush.msra.mxu0 0.0
    %79 = vmatpush.msra.mxu0 0.0
    %80 = vmatpush.msra.mxu0 0.0
    %81 = vmatpush.msra.mxu0 0.0
    %82 = vmatpush.msra.mxu0 0.0
    %83 = vmatpush.msra.mxu0 0.0
    %84 = vmatpush.msra.mxu0 0.0
    %85 = vmatpush.msra.mxu0 %v63
    %86 = vmatpush.msra.mxu0 %v60
    %87 = vmatpush.msra.mxu0 %v57
    %88 = vmatpush.msra.mxu0 %v54
    %89 = vmatmul.f32.gmra.mxu0 %v68
    %v90 = vpop.f32.mrf.mxu0
    %v91 = vadd.f32 0.0, %v90
    %92 = vmatmul.f32.gmra.mxu0 %v71
    %v93 = vpop.f32.mrf.mxu0
    %v94 = vadd.f32 0.0, %v93
    %95 = vdwg.mxu0
    %96 = vmatpush.msra.mxu0 0.0
    %97 = vmatpush.msra.mxu0 0.0
    %98 = vmatpush.msra.mxu0 0.0
    %99 = vmatpush.msra.mxu0 0.0
    %100 = vmatpush.msra.mxu0 0.0
    %101 = vmatpush.msra.mxu0 0.0
    %102 = vmatpush.msra.mxu0 0.0
    %103 = vmatpush.msra.mxu0 0.0
    %104 = vmatpush.msra.mxu0 0.0
    %105 = vmatpush.msra.mxu0 0.0
    %106 = vmatpush.msra.mxu0 0.0
    %107 = vmatpush.msra.mxu0 0.0
    %108 = vmatpush.msra.mxu0 %v64
    %109 = vmatpush.msra.mxu0 %v61
    %110 = vmatpush.msra.mxu0 %v58
    %111 = vmatpush.msra.mxu0 %v55
    %112 = vmatmul.f32.gmra.mxu0 %v68
    %v113 = vpop.f32.mrf.mxu0
    %v114 = vadd.f32 0.0, %v113
    %115 = vmatmul.f32.gmra.mxu0 %v71
    %v116 = vpop.f32.mrf.mxu0
    %v117 = vadd.f32 0.0, %v116
    %118 = vdwg.mxu0
    %119 = vmatpush.msra.mxu0 0.0
    %120 = vmatpush.msra.mxu0 0.0
    %121 = vmatpush.msra.mxu0 0.0
    %122 = vmatpush.msra.mxu0 0.0
    %123 = vmatpush.msra.mxu0 0.0
    %124 = vmatpush.msra.mxu0 0.0
    %125 = vmatpush.msra.mxu0 0.0
    %126 = vmatpush.msra.mxu0 0.0
    %127 = vmatpush.msra.mxu0 0.0
    %128 = vmatpush.msra.mxu0 0.0
    %129 = vmatpush.msra.mxu0 0.0
    %130 = vmatpush.msra.mxu0 0.0
    %131 = vmatpush.msra.mxu0 %v65
    %132 = vmatpush.msra.mxu0 %v62
    %133 = vmatpush.msra.mxu0 %v59
    %134 = vmatpush.msra.mxu0 %v56
    %135 = vmatmul.f32.gmra.mxu0 %v68
    %v136 = vpop.f32.mrf.mxu0
    %v137 = vadd.f32 0.0, %v136
    %138 = vmatmul.f32.gmra.mxu0 %v71
    %v139 = vpop.f32.mrf.mxu0
    %v140 = vadd.f32 0.0, %v139
    %141 = vdwg.mxu0
    %v142 = vld [vmem:[%s6] sm:$0x1]
    %v143 = vperm.slane %v142, 0
    %v144 = vadd.f32 %v91, %v143
    %v145 = vadd.f32 %v94, %v143
    %v146 = vld [vmem:[%s6 + $0x1] sm:$0x1]
    %v147 = vperm.slane %v146, 0
    %v148 = vadd.f32 %v114, %v147
    %v149 = vadd.f32 %v117, %v147
    %v150 = vld [vmem:[%s6 + $0x2] sm:$0x1]
    %v151 = vperm.slane %v150, 0
    %v152 = vadd.f32 %v137, %v151
    %v153 = vadd.f32 %v140, %v151
    %v154 = vld [vmem:[%s3] sm:$0x3]
    %v156 = vsel %vm66, %v144, 0
    %v159 = vsel %vm66, %v148, 0
    %161 = vmatpush.xpose.msra.mxu0 0.0
    %162 = vmatpush.xpose.msra.mxu0 0.0
    %163 = vmatpush.xpose.msra.mxu0 0.0
    %164 = vmatpush.xpose.msra.mxu0 0.0
    %165 = vmatpush.xpose.msra.mxu0 0.0
    %166 = vmatpush.xpose.msra.mxu0 0.0
    %167 = vmatpush.xpose.msra.mxu0 0.0
    %168 = vmatpush.xpose.msra.mxu0 0.0
    %169 = vmatpush.xpose.msra.mxu0 0.0
    %170 = vmatpush.xpose.msra.mxu0 0.0
    %171 = vmatpush.xpose.msra.mxu0 0.0
    %172 = vmatpush.xpose.msra.mxu0 0.0
    %173 = vmatpush.xpose.msra.mxu0 0.0
    %174 = vmatpush.xpose.msra.mxu0 0.0
    %175 = vmatpush.xpose.msra.mxu0 0.0
    %176 = vmatpush.xpose.msra.mxu0 %v159
    %177 = vmatmul.f32.gmra.mxu0 %v156
    %v178 = vpop.f32.mrf.mxu0
    %v179 = vadd.f32 0.0, %v178
    %180 = vdwg.mxu0
    %v182 = vsel %vm66, %v145, 0
    %v185 = vsel %vm66, %v149, 0
    %187 = vmatpush.xpose.msra.mxu0 0.0
    %188 = vmatpush.xpose.msra.mxu0 0.0
    %189 = vmatpush.xpose.msra.mxu0 0.0
    %190 = vmatpush.xpose.msra.mxu0 0.0
    %191 = vmatpush.xpose.msra.mxu0 0.0
    %192 = vmatpush.xpose.msra.mxu0 0.0
    %193 = vmatpush.xpose.msra.mxu0 0.0
    %194 = vmatpush.xpose.msra.mxu0 0.0
    %195 = vmatpush.xpose.msra.mxu0 0.0
    %196 = vmatpush.xpose.msra.mxu0 0.0
    %197 = vmatpush.xpose.msra.mxu0 0.0
    %198 = vmatpush.xpose.msra.mxu0 0.0
    %199 = vmatpush.xpose.msra.mxu0 0.0
    %200 = vmatpush.xpose.msra.mxu0 0.0
    %201 = vmatpush.xpose.msra.mxu0 0.0
    %202 = vmatpush.xpose.msra.mxu0 %v185
    %203 = vmatmul.f32.gmra.mxu0 %v182
    %v204 = vpop.f32.mrf.mxu0
    %v205 = vadd.f32 0.0, %v204
    %206 = vdwg.mxu0
    %v207 = vmul.f32 %v179, 0.17677669
    %v208 = vmul.f32 %v205, 0.17677669
    %v210 = vrot.slane %v154, 1
    %v211 = vperm.slane %v154, 0
    %v212 = vperm.slane %v210, 0
    %v215 = vadd.f32 %v207, %v211
    %v216 = vadd.f32 %v208, %v212
    %vm217 = vcmask 64512
    %v218 = vsel %vm217, %v215, -inf
    %219 = vmax.xlane.f32.xlu0 %v218
    %v220 = vpop.xlane.xlu0 %219
    %v221 = vsel %vm217, %v216, -inf
    %222 = vmax.xlane.f32.xlu0 %v221
    %v223 = vpop.xlane.xlu0 %222
    %v224 = vsub.f32 %v215, %v220
    %v225 = vsub.f32 %v216, %v223
    %v226 = vmul.f32 %v224, 1.442695
    %v227 = vpow.pop %v226
    %v228 = vmul.f32 %v225, 1.442695
    %v229 = vpow.pop %v228
    %v230 = vsel %vm217, %v227, 0.0
    %231 = vadd.xlane.f32.xlu0 %v230
    %v232 = vpop.xlane.xlu0 %231
    %v233 = vsel %vm217, %v229, 0.0
    %234 = vadd.xlane.f32.xlu0 %v233
    %v235 = vpop.xlane.xlu0 %234
    %v236 = vrcp.pop %v232
    %v237 = vrcp.pop %v235
    %v238 = vmul.f32 %v227, %v236
    %v239 = vmul.f32 %v229, %v237
    %v241 = vsel %vm217, %v238, 0
    %243 = vmatpush.msra.mxu0 0.0
    %244 = vmatpush.msra.mxu0 0.0
    %245 = vmatpush.msra.mxu0 0.0
    %246 = vmatpush.msra.mxu0 0.0
    %247 = vmatpush.msra.mxu0 0.0
    %248 = vmatpush.msra.mxu0 0.0
    %249 = vmatpush.msra.mxu0 0.0
    %250 = vmatpush.msra.mxu0 0.0
    %251 = vmatpush.msra.mxu0 0.0
    %252 = vmatpush.msra.mxu0 0.0
    %253 = vmatpush.msra.mxu0 0.0
    %254 = vmatpush.msra.mxu0 0.0
    %255 = vmatpush.msra.mxu0 0.0
    %256 = vmatpush.msra.mxu0 0.0
    %257 = vmatpush.msra.mxu0 0.0
    %258 = vmatpush.msra.mxu0 %v152
    %259 = vmatmul.f32.gmra.mxu0 %v241
    %v260 = vpop.f32.mrf.mxu0
    %v261 = vadd.f32 0.0, %v260
    %262 = vdwg.mxu0
    %v264 = vsel %vm217, %v239, 0
    %266 = vmatpush.msra.mxu0 0.0
    %267 = vmatpush.msra.mxu0 0.0
    %268 = vmatpush.msra.mxu0 0.0
    %269 = vmatpush.msra.mxu0 0.0
    %270 = vmatpush.msra.mxu0 0.0
    %271 = vmatpush.msra.mxu0 0.0
    %272 = vmatpush.msra.mxu0 0.0
    %273 = vmatpush.msra.mxu0 0.0
    %274 = vmatpush.msra.mxu0 0.0
    %275 = vmatpush.msra.mxu0 0.0
    %276 = vmatpush.msra.mxu0 0.0
    %277 = vmatpush.msra.mxu0 0.0
    %278 = vmatpush.msra.mxu0 0.0
    %279 = vmatpush.msra.mxu0 0.0
    %280 = vmatpush.msra.mxu0 0.0
    %281 = vmatpush.msra.mxu0 %v153
    %282 = vmatmul.f32.gmra.mxu0 %v264
    %v283 = vpop.f32.mrf.mxu0
    %v284 = vadd.f32 0.0, %v283
    %285 = vdwg.mxu0
    %v286 = vld [vmem:[%s4] sm:$0xff]
    %v287 = vld [vmem:[%s4 + $0x8] sm:$0xff]
    %v288 = vld [vmem:[%s4 + $0x10] sm:$0xff]
    %v289 = vld [vmem:[%s4 + $0x18] sm:$0xff]
    %v290 = vld [vmem:[%s4 + $0x20] sm:$0xff]
    %v291 = vld [vmem:[%s4 + $0x28] sm:$0xff]
    %v292 = vld [vmem:[%s4 + $0x30] sm:$0xff]
    %v293 = vld [vmem:[%s4 + $0x38] sm:$0xff]
    %v294 = vld [vmem:[#allocation5 + $0x18] sm:$0xff]
    %v295 = vld [vmem:[#allocation5 + $0x68] sm:$0xff]
    %v296 = vld [vmem:[#allocation5 + $0xb8] sm:$0xff]
    %v297 = vld [vmem:[#allocation5 + $0x108] sm:$0xff]
    %v298 = vld [vmem:[%s6 + $0x3] sm:$0x1]
    %v299 = vperm.slane %v298, 0
    %v301 = vsel %vm66, %v286, 0
    %v304 = vsel %vm66, %v287, 0
    %v307 = vsel %vm66, %v288, 0
    %v310 = vsel %vm66, %v289, 0
    %v313 = vsel %vm66, %v290, 0
    %v316 = vsel %vm66, %v291, 0
    %v319 = vsel %vm66, %v292, 0
    %v322 = vsel %vm66, %v293, 0
    %324 = vmatpush.msra.mxu0 0.0
    %325 = vmatpush.msra.mxu0 0.0
    %326 = vmatpush.msra.mxu0 0.0
    %327 = vmatpush.msra.mxu0 0.0
    %328 = vmatpush.msra.mxu0 0.0
    %329 = vmatpush.msra.mxu0 0.0
    %330 = vmatpush.msra.mxu0 0.0
    %331 = vmatpush.msra.mxu0 0.0
    %332 = vmatpush.msra.mxu0 0.0
    %333 = vmatpush.msra.mxu0 0.0
    %334 = vmatpush.msra.mxu0 0.0
    %335 = vmatpush.msra.mxu0 0.0
    %336 = vmatpush.msra.mxu0 %v297
    %337 = vmatpush.msra.mxu0 %v296
    %338 = vmatpush.msra.mxu0 %v295
    %339 = vmatpush.msra.mxu0 %v294
    %340 = vmatmul.f32.gmra.mxu0 %v301
    %v341 = vpop.f32.mrf.mxu0
    %v342 = vadd.f32 %v299, %v341
    %343 = vmatmul.f32.gmra.mxu0 %v304
    %v344 = vpop.f32.mrf.mxu0
    %v345 = vadd.f32 %v299, %v344
    %346 = vmatmul.f32.gmra.mxu0 %v307
    %v347 = vpop.f32.mrf.mxu0
    %v348 = vadd.f32 %v299, %v347
    %349 = vmatmul.f32.gmra.mxu0 %v310
    %v350 = vpop.f32.mrf.mxu0
    %v351 = vadd.f32 %v299, %v350
    %352 = vmatmul.f32.gmra.mxu0 %v313
    %v353 = vpop.f32.mrf.mxu0
    %v354 = vadd.f32 %v299, %v353
    %355 = vmatmul.f32.gmra.mxu0 %v316
    %v356 = vpop.f32.mrf.mxu0
    %v357 = vadd.f32 %v299, %v356
    %358 = vmatmul.f32.gmra.mxu0 %v319
    %v359 = vpop.f32.mrf.mxu0
    %v360 = vadd.f32 %v299, %v359
    %361 = vmatmul.f32.gmra.mxu0 %v322
    %v362 = vpop.f32.mrf.mxu0
    %v363 = vadd.f32 %v299, %v362
    %364 = vdwg.mxu0
    %v365 = vtanh.pop %v342
    %v366 = vtanh.pop %v345
    %v367 = vtanh.pop %v348
    %v368 = vtanh.pop %v351
    %v369 = vtanh.pop %v354
    %v370 = vtanh.pop %v357
    %v371 = vtanh.pop %v360
    %v372 = vtanh.pop %v363
    %v373 = vld [vmem:[#allocation5 + $0x28] sm:$0xff]
    %v374 = vld [vmem:[#allocation5 + $0x78] sm:$0xff]
    %v375 = vld [vmem:[#allocation5 + $0xc8] sm:$0xff]
    %v376 = vld [vmem:[#allocation5 + $0x118] sm:$0xff]
    %v377 = vld [vmem:[%s6 + $0x5] sm:$0x1]
    %v378 = vperm.slane %v377, 0
    %v380 = vsel %vm66, %v365, 0
    %v383 = vsel %vm66, %v366, 0
    %v386 = vsel %vm66, %v367, 0
    %v389 = vsel %vm66, %v368, 0
    %v392 = vsel %vm66, %v369, 0
    %v395 = vsel %vm66, %v370, 0
    %v398 = vsel %vm66, %v371, 0
    %v401 = vsel %vm66, %v372, 0
    %403 = vmatpush.msra.mxu0 0.0
    %404 = vmatpush.msra.mxu0 0.0
    %405 = vmatpush.msra.mxu0 0.0
    %406 = vmatpush.msra.mxu0 0.0
    %407 = vmatpush.msra.mxu0 0.0
    %408 = vmatpush.msra.mxu0 0.0
    %409 = vmatpush.msra.mxu0 0.0
    %410 = vmatpush.msra.mxu0 0.0
    %411 = vmatpush.msra.mxu0 0.0
    %412 = vmatpush.msra.mxu0 0.0
    %413 = vmatpush.msra.mxu0 0.0
    %414 = vmatpush.msra.mxu0 0.0
    %415 = vmatpush.msra.mxu0 %v376
    %416 = vmatpush.msra.mxu0 %v375
    %417 = vmatpush.msra.mxu0 %v374
    %418 = vmatpush.msra.mxu0 %v373
    %419 = vmatmul.f32.gmra.mxu0 %v380
    %v420 = vpop.f32.mrf.mxu0
    %v421 = vadd.f32 %v378, %v420
    %422 = vmatmul.f32.gmra.mxu0 %v383
    %v423 = vpop.f32.mrf.mxu0
    %v424 = vadd.f32 %v378, %v423
    %425 = vmatmul.f32.gmra.mxu0 %v386
    %v426 = vpop.f32.mrf.mxu0
    %v427 = vadd.f32 %v378, %v426
    %428 = vmatmul.f32.gmra.mxu0 %v389
    %v429 = vpop.f32.mrf.mxu0
    %v430 = vadd.f32 %v378, %v429
    %431 = vmatmul.f32.gmra.mxu0 %v392
    %v432 = vpop.f32.mrf.mxu0
    %v433 = vadd.f32 %v378, %v432
    %434 = vmatmul.f32.gmra.mxu0 %v395
    %v435 = vpop.f32.mrf.mxu0
    %v436 = vadd.f32 %v378, %v435
    %437 = vmatmul.f32.gmra.mxu0 %v398
    %v438 = vpop.f32.mrf.mxu0
    %v439 = vadd.f32 %v378, %v438
    %440 = vmatmul.f32.gmra.mxu0 %v401
    %v441 = vpop.f32.mrf.mxu0
    %v442 = vadd.f32 %v378, %v441
    %443 = vdwg.mxu0
    %v444 = vld [vmem:[#allocation5 + $0x20] sm:$0xff]
    %v445 = vld [vmem:[#allocation5 + $0x70] sm:$0xff]
    %v446 = vld [vmem:[#allocation5 + $0xc0] sm:$0xff]
    %v447 = vld [vmem:[#allocation5 + $0x110] sm:$0xff]
    %v448 = vld [vmem:[%s6 + $0x4] sm:$0x1]
    %v449 = vperm.slane %v448, 0
    %v451 = vsel %vm66, %v261, 0
    %v454 = vsel %vm66, %v284, 0
    %456 = vmatpush.msra.mxu0 0.0
    %457 = vmatpush.msra.mxu0 0.0
    %458 = vmatpush.msra.mxu0 0.0
    %459 = vmatpush.msra.mxu0 0.0
    %460 = vmatpush.msra.mxu0 0.0
    %461 = vmatpush.msra.mxu0 0.0
    %462 = vmatpush.msra.mxu0 0.0
    %463 = vmatpush.msra.mxu0 0.0
    %464 = vmatpush.msra.mxu0 0.0
    %465 = vmatpush.msra.mxu0 0.0
    %466 = vmatpush.msra.mxu0 0.0
    %467 = vmatpush.msra.mxu0 0.0
    %468 = vmatpush.msra.mxu0 %v447
    %469 = vmatpush.msra.mxu0 %v446
    %470 = vmatpush.msra.mxu0 %v445
    %471 = vmatpush.msra.mxu0 %v444
    %472 = vmatmul.f32.gmra.mxu0 %v451
    %v473 = vpop.f32.mrf.mxu0
    %v474 = vadd.f32 %v449, %v473
    %475 = vmatmul.f32.gmra.mxu0 %v454
    %v476 = vpop.f32.mrf.mxu0
    %v477 = vadd.f32 %v449, %v476
    %478 = vdwg.mxu0
    %vm479 = vcmask 130048
    %v481 = vsel %vm479, %v474, 0
    %v484 = vsel %vm479, %v421, 0
    %v487 = vsel %vm479, %v424, 0
    %v490 = vsel %vm479, %v427, 0
    %v493 = vsel %vm479, %v430, 0
    %495 = vmatpush.xpose.msra.mxu0 0.0
    %496 = vmatpush.xpose.msra.mxu0 0.0
    %497 = vmatpush.xpose.msra.mxu0 0.0
    %498 = vmatpush.xpose.msra.mxu0 0.0
    %499 = vmatpush.xpose.msra.mxu0 0.0
    %500 = vmatpush.xpose.msra.mxu0 0.0
    %501 = vmatpush.xpose.msra.mxu0 0.0
    %502 = vmatpush.xpose.msra.mxu0 0.0
    %503 = vmatpush.xpose.msra.mxu0 0.0
    %504 = vmatpush.xpose.msra.mxu0 0.0
    %505 = vmatpush.xpose.msra.mxu0 0.0
    %506 = vmatpush.xpose.msra.mxu0 0.0
    %507 = vmatpush.xpose.msra.mxu0 %v493
    %508 = vmatpush.xpose.msra.mxu0 %v490
    %509 = vmatpush.xpose.msra.mxu0 %v487
    %510 = vmatpush.xpose.msra.mxu0 %v484
    %511 = vmatmul.f32.gmra.mxu0 %v481
    %v512 = vpop.f32.mrf.mxu0
    %v513 = vadd.f32 0.0, %v512
    %514 = vdwg.mxu0
    %v516 = vsel %vm479, %v477, 0
    %v519 = vsel %vm479, %v433, 0
    %v522 = vsel %vm479, %v436, 0
    %v525 = vsel %vm479, %v439, 0
    %v528 = vsel %vm479, %v442, 0
    %530 = vmatpush.xpose.msra.mxu0 0.0
    %531 = vmatpush.xpose.msra.mxu0 0.0
    %532 = vmatpush.xpose.msra.mxu0 0.0
    %533 = vmatpush.xpose.msra.mxu0 0.0
    %534 = vmatpush.xpose.msra.mxu0 0.0
    %535 = vmatpush.xpose.msra.mxu0 0.0
    %536 = vmatpush.xpose.msra.mxu0 0.0
    %537 = vmatpush.xpose.msra.mxu0 0.0
    %538 = vmatpush.xpose.msra.mxu0 0.0
    %539 = vmatpush.xpose.msra.mxu0 0.0
    %540 = vmatpush.xpose.msra.mxu0 0.0
    %541 = vmatpush.xpose.msra.mxu0 0.0
    %542 = vmatpush.xpose.msra.mxu0 %v528
    %543 = vmatpush.xpose.msra.mxu0 %v525
    %544 = vmatpush.xpose.msra.mxu0 %v522
    %545 = vmatpush.xpose.msra.mxu0 %v519
    %546 = vmatmul.f32.gmra.mxu0 %v516
    %v547 = vpop.f32.mrf.mxu0
    %v548 = vadd.f32 0.0, %v547
    %549 = vdwg.mxu0
    %v550 = vmul.f32 %v513, 0.25
    %v551 = vmul.f32 %v548, 0.25
    %v552 = vsel %vm217, %v550, -inf
    %553 = vmax.xlane.f32.xlu0 %v552
    %v554 = vpop.xlane.xlu0 %553
    %v555 = vsel %vm217, %v551, -inf
    %556 = vmax.xlane.f32.xlu0 %v555
    %v557 = vpop.xlane.xlu0 %556
    %v558 = vsub.f32 %v550, %v554
    %v559 = vsub.f32 %v551, %v557
    %v560 = vmul.f32 %v558, 1.442695
    %v561 = vpow.pop %v560
    %v562 = vmul.f32 %v559, 1.442695
    %v563 = vpow.pop %v562
    %v564 = vsel %vm217, %v561, 0.0
    %565 = vadd.xlane.f32.xlu0 %v564
    %v566 = vpop.xlane.xlu0 %565
    %v567 = vsel %vm217, %v563, 0.0
    %568 = vadd.xlane.f32.xlu0 %v567
    %v569 = vpop.xlane.xlu0 %568
    %v570 = vrcp.pop %v566
    %v571 = vrcp.pop %v569
    %v572 = vmul.f32 %v561, %v570
    %v573 = vmul.f32 %v563, %v571
    %v575 = vsel %vm217, %v572, 0
    %577 = vmatpush.msra.mxu0 0.0
    %578 = vmatpush.msra.mxu0 0.0
    %579 = vmatpush.msra.mxu0 0.0
    %580 = vmatpush.msra.mxu0 0.0
    %581 = vmatpush.msra.mxu0 0.0
    %582 = vmatpush.msra.mxu0 0.0
    %583 = vmatpush.msra.mxu0 0.0
    %584 = vmatpush.msra.mxu0 0.0
    %585 = vmatpush.msra.mxu0 0.0
    %586 = vmatpush.msra.mxu0 0.0
    %587 = vmatpush.msra.mxu0 0.0
    %588 = vmatpush.msra.mxu0 0.0
    %589 = vmatpush.msra.mxu0 0.0
    %590 = vmatpush.msra.mxu0 0.0
    %591 = vmatpush.msra.mxu0 0.0
    %592 = vmatpush.msra.mxu0 %v365
    %593 = vmatmul.f32.gmra.mxu0 %v575
    %v594 = vpop.f32.mrf.mxu0
    %v595 = vadd.f32 0.0, %v594
    %596 = vdwg.mxu0
    %v598 = vsel %vm217, %v573, 0
    %600 = vmatpush.msra.mxu0 0.0
    %601 = vmatpush.msra.mxu0 0.0
    %602 = vmatpush.msra.mxu0 0.0
    %603 = vmatpush.msra.mxu0 0.0
    %604 = vmatpush.msra.mxu0 0.0
    %605 = vmatpush.msra.mxu0 0.0
    %606 = vmatpush.msra.mxu0 0.0
    %607 = vmatpush.msra.mxu0 0.0
    %608 = vmatpush.msra.mxu0 0.0
    %609 = vmatpush.msra.mxu0 0.0
    %610 = vmatpush.msra.mxu0 0.0
    %611 = vmatpush.msra.mxu0 0.0
    %612 = vmatpush.msra.mxu0 0.0
    %613 = vmatpush.msra.mxu0 0.0
    %614 = vmatpush.msra.mxu0 0.0
    %615 = vmatpush.msra.mxu0 %v369
    %616 = vmatmul.f32.gmra.mxu0 %v598
    %v617 = vpop.f32.mrf.mxu0
    %v618 = vadd.f32 0.0, %v617
    %619 = vdwg.mxu0
    %vm620 = vcmask 130112
    %v621 = vsel %vm620, %v550, -inf
    %622 = vmax.xlane.f32.xlu0 %v621
    %v623 = vpop.xlane.xlu0 %622
    %v624 = vsel %vm620, %v551, -inf
    %625 = vmax.xlane.f32.xlu0 %v624
    %v626 = vpop.xlane.xlu0 %625
    %v627 = vsub.f32 %v550, %v623
    %v628 = vsub.f32 %v551, %v626
    %v629 = vmul.f32 %v627, 1.442695
    %v630 = vpow.pop %v629
    %v631 = vmul.f32 %v628, 1.442695
    %v632 = vpow.pop %v631
    %635 = vrot.lane.b32.xlu0 %v630, 120
    %v636 = vpop.permute.xlu0 %635
    %637 = vrot.lane.b32.xlu0 %v632, 120
    %v638 = vpop.permute.xlu0 %637
    %v641 = vsel %vm217, %v636, 0.0
    %642 = vadd.xlane.f32.xlu0 %v641
    %v643 = vpop.xlane.xlu0 %642
    %v644 = vsel %vm217, %v638, 0.0
    %645 = vadd.xlane.f32.xlu0 %v644
    %v646 = vpop.xlane.xlu0 %645
    %v647 = vrcp.pop %v643
    %v648 = vrcp.pop %v646
    %v649 = vmul.f32 %v630, %v647
    %v650 = vmul.f32 %v632, %v648
    %652 = vrot.lane.b32.xlu0 %v649, 120
    %v653 = vpop.permute.xlu0 %652
    %v654 = vsel %vm217, %v653, 0
    %656 = vmatpush.msra.mxu0 0.0
    %657 = vmatpush.msra.mxu0 0.0
    %658 = vmatpush.msra.mxu0 0.0
    %659 = vmatpush.msra.mxu0 0.0
    %660 = vmatpush.msra.mxu0 0.0
    %661 = vmatpush.msra.mxu0 0.0
    %662 = vmatpush.msra.mxu0 0.0
    %663 = vmatpush.msra.mxu0 0.0
    %664 = vmatpush.msra.mxu0 0.0
    %665 = vmatpush.msra.mxu0 0.0
    %666 = vmatpush.msra.mxu0 0.0
    %667 = vmatpush.msra.mxu0 0.0
    %668 = vmatpush.msra.mxu0 0.0
    %669 = vmatpush.msra.mxu0 0.0
    %670 = vmatpush.msra.mxu0 0.0
    %671 = vmatpush.msra.mxu0 %v366
    %672 = vmatmul.f32.gmra.mxu0 %v654
    %v673 = vpop.f32.mrf.mxu0
    %v674 = vadd.f32 0.0, %v673
    %675 = vdwg.mxu0
    %677 = vrot.lane.b32.xlu0 %v650, 120
    %v678 = vpop.permute.xlu0 %677
    %v679 = vsel %vm217, %v678, 0
    %681 = vmatpush.msra.mxu0 0.0
    %682 = vmatpush.msra.mxu0 0.0
    %683 = vmatpush.msra.mxu0 0.0
    %684 = vmatpush.msra.mxu0 0.0
    %685 = vmatpush.msra.mxu0 0.0
    %686 = vmatpush.msra.mxu0 0.0
    %687 = vmatpush.msra.mxu0 0.0
    %688 = vmatpush.msra.mxu0 0.0
    %689 = vmatpush.msra.mxu0 0.0
    %690 = vmatpush.msra.mxu0 0.0
    %691 = vmatpush.msra.mxu0 0.0
    %692 = vmatpush.msra.mxu0 0.0
    %693 = vmatpush.msra.mxu0 0.0
    %694 = vmatpush.msra.mxu0 0.0
    %695 = vmatpush.msra.mxu0 0.0
    %696 = vmatpush.msra.mxu0 %v370
    %697 = vmatmul.f32.gmra.mxu0 %v679
    %v698 = vpop.f32.mrf.mxu0
    %v699 = vadd.f32 0.0, %v698
    %700 = vdwg.mxu0
    %vm701 = vcmask 195712
    %v702 = vsel %vm701, %v550, -inf
    %703 = vmax.xlane.f32.xlu0 %v702
    %v704 = vpop.xlane.xlu0 %703
    %v705 = vsel %vm701, %v551, -inf
    %706 = vmax.xlane.f32.xlu0 %v705
    %v707 = vpop.xlane.xlu0 %706
    %v708 = vsub.f32 %v550, %v704
    %v709 = vsub.f32 %v551, %v707
    %v710 = vmul.f32 %v708, 1.442695
    %v711 = vpow.pop %v710
    %v712 = vmul.f32 %v709, 1.442695
    %v713 = vpow.pop %v712
    %716 = vrot.lane.b32.xlu0 %v711, 112
    %v717 = vpop.permute.xlu0 %716
    %718 = vrot.lane.b32.xlu0 %v713, 112
    %v719 = vpop.permute.xlu0 %718
    %v722 = vsel %vm217, %v717, 0.0
    %723 = vadd.xlane.f32.xlu0 %v722
    %v724 = vpop.xlane.xlu0 %723
    %v725 = vsel %vm217, %v719, 0.0
    %726 = vadd.xlane.f32.xlu0 %v725
    %v727 = vpop.xlane.xlu0 %726
    %v728 = vrcp.pop %v724
    %v729 = vrcp.pop %v727
    %v730 = vmul.f32 %v711, %v728
    %v731 = vmul.f32 %v713, %v729
    %733 = vrot.lane.b32.xlu0 %v730, 112
    %v734 = vpop.permute.xlu0 %733
    %v735 = vsel %vm217, %v734, 0
    %737 = vmatpush.msra.mxu0 0.0
    %738 = vmatpush.msra.mxu0 0.0
    %739 = vmatpush.msra.mxu0 0.0
    %740 = vmatpush.msra.mxu0 0.0
    %741 = vmatpush.msra.mxu0 0.0
    %742 = vmatpush.msra.mxu0 0.0
    %743 = vmatpush.msra.mxu0 0.0
    %744 = vmatpush.msra.mxu0 0.0
    %745 = vmatpush.msra.mxu0 0.0
    %746 = vmatpush.msra.mxu0 0.0
    %747 = vmatpush.msra.mxu0 0.0
    %748 = vmatpush.msra.mxu0 0.0
    %749 = vmatpush.msra.mxu0 0.0
    %750 = vmatpush.msra.mxu0 0.0
    %751 = vmatpush.msra.mxu0 0.0
    %752 = vmatpush.msra.mxu0 %v367
    %753 = vmatmul.f32.gmra.mxu0 %v735
    %v754 = vpop.f32.mrf.mxu0
    %v755 = vadd.f32 0.0, %v754
    %756 = vdwg.mxu0
    %758 = vrot.lane.b32.xlu0 %v731, 112
    %v759 = vpop.permute.xlu0 %758
    %v760 = vsel %vm217, %v759, 0
    %762 = vmatpush.msra.mxu0 0.0
    %763 = vmatpush.msra.mxu0 0.0
    %764 = vmatpush.msra.mxu0 0.0
    %765 = vmatpush.msra.mxu0 0.0
    %766 = vmatpush.msra.mxu0 0.0
    %767 = vmatpush.msra.mxu0 0.0
    %768 = vmatpush.msra.mxu0 0.0
    %769 = vmatpush.msra.mxu0 0.0
    %770 = vmatpush.msra.mxu0 0.0
    %771 = vmatpush.msra.mxu0 0.0
    %772 = vmatpush.msra.mxu0 0.0
    %773 = vmatpush.msra.mxu0 0.0
    %774 = vmatpush.msra.mxu0 0.0
    %775 = vmatpush.msra.mxu0 0.0
    %776 = vmatpush.msra.mxu0 0.0
    %777 = vmatpush.msra.mxu0 %v371
    %778 = vmatmul.f32.gmra.mxu0 %v760
    %v779 = vpop.f32.mrf.mxu0
    %v780 = vadd.f32 0.0, %v779
    %781 = vdwg.mxu0
    %vm782 = vcmask 261312
    %v783 = vsel %vm782, %v550, -inf
    %784 = vmax.xlane.f32.xlu0 %v783
    %v785 = vpop.xlane.xlu0 %784
    %v786 = vsel %vm782, %v551, -inf
    %787 = vmax.xlane.f32.xlu0 %v786
    %v788 = vpop.xlane.xlu0 %787
    %v789 = vsub.f32 %v550, %v785
    %v790 = vsub.f32 %v551, %v788
    %v791 = vmul.f32 %v789, 1.442695
    %v792 = vpow.pop %v791
    %v793 = vmul.f32 %v790, 1.442695
    %v794 = vpow.pop %v793
    %797 = vrot.lane.b32.xlu0 %v792, 104
    %v798 = vpop.permute.xlu0 %797
    %799 = vrot.lane.b32.xlu0 %v794, 104
    %v800 = vpop.permute.xlu0 %799
    %v803 = vsel %vm217, %v798, 0.0
    %804 = vadd.xlane.f32.xlu0 %v803
    %v805 = vpop.xlane.xlu0 %804
    %v806 = vsel %vm217, %v800, 0.0
    %807 = vadd.xlane.f32.xlu0 %v806
    %v808 = vpop.xlane.xlu0 %807
    %v809 = vrcp.pop %v805
    %v810 = vrcp.pop %v808
    %v811 = vmul.f32 %v792, %v809
    %v812 = vmul.f32 %v794, %v810
    %814 = vrot.lane.b32.xlu0 %v811, 104
    %v815 = vpop.permute.xlu0 %814
    %v816 = vsel %vm217, %v815, 0
    %818 = vmatpush.msra.mxu0 0.0
    %819 = vmatpush.msra.mxu0 0.0
    %820 = vmatpush.msra.mxu0 0.0
    %821 = vmatpush.msra.mxu0 0.0
    %822 = vmatpush.msra.mxu0 0.0
    %823 = vmatpush.msra.mxu0 0.0
    %824 = vmatpush.msra.mxu0 0.0
    %825 = vmatpush.msra.mxu0 0.0
    %826 = vmatpush.msra.mxu0 0.0
    %827 = vmatpush.msra.mxu0 0.0
    %828 = vmatpush.msra.mxu0 0.0
    %829 = vmatpush.msra.mxu0 0.0
    %830 = vmatpush.msra.mxu0 0.0
    %831 = vmatpush.msra.mxu0 0.0
    %832 = vmatpush.msra.mxu0 0.0
    %833 = vmatpush.msra.mxu0 %v368
    %834 = vmatmul.f32.gmra.mxu0 %v816
    %v835 = vpop.f32.mrf.mxu0
    %v836 = vadd.f32 0.0, %v835
    %837 = vdwg.mxu0
    %839 = vrot.lane.b32.xlu0 %v812, 104
    %v840 = vpop.permute.xlu0 %839
    %v841 = vsel %vm217, %v840, 0
    %843 = vmatpush.msra.mxu0 0.0
    %844 = vmatpush.msra.mxu0 0.0
    %845 = vmatpush.msra.mxu0 0.0
    %846 = vmatpush.msra.mxu0 0.0
    %847 = vmatpush.msra.mxu0 0.0
    %848 = vmatpush.msra.mxu0 0.0
    %849 = vmatpush.msra.mxu0 0.0
    %850 = vmatpush.msra.mxu0 0.0
    %851 = vmatpush.msra.mxu0 0.0
    %852 = vmatpush.msra.mxu0 0.0
    %853 = vmatpush.msra.mxu0 0.0
    %854 = vmatpush.msra.mxu0 0.0
    %855 = vmatpush.msra.mxu0 0.0
    %856 = vmatpush.msra.mxu0 0.0
    %857 = vmatpush.msra.mxu0 0.0
    %858 = vmatpush.msra.mxu0 %v372
    %859 = vmatmul.f32.gmra.mxu0 %v841
    %v860 = vpop.f32.mrf.mxu0
    %v861 = vadd.f32 0.0, %v860
    %862 = vdwg.mxu0
    %v863 = vlaneseq
    %v864 = vshrl.u32 %v863, 7
    %v865 = vadd.s32 %v864, 8
    %v866 = vlaneseq
    %v867 = vand.u32 %v866, 127
    %s868 = sld [smem:[#allocation3]]
    %s869 = sld [smem:[#allocation3 + $0x1]]
    %s870 = ssub.s32 %s869, %s868
    %p871 = scmp.gt.s32.totalorder %s870, 1
    %s872 = scalar_select %p871, %s870, 1
    %s873 = scvt.s32.f32 %s872
    %v874 = vstv %s873
    %v875 = vrcp.pop %v874
    %v876 = vmul.f32 %v874, %v875
    %v877 = vsub.f32 1.0, %v876
    %v878 = vmul.f32 %v875, %v877
    %v879 = vadd.f32 %v875, %v878
    %vm880 = vweird.f32 %v874
    %vm881 = vweird.f32 %v875
    %vm882 = vmor %vm880, %vm881
    %v883 = vsel %vm882, %v875, %v879
    %v884 = vand.u32 2147483647, %v874
    %vm885 = vcmp.eq.f32.partialorder %v884, 8.507059e+37
    %v886 = vand.u32 %v874, 2147483648
    %v887 = vor.u32 1.1754944e-38, %v886
    %v888 = vsel %vm885, %v887, %v883
    %s889 = vtos %v888
    %v890 = vstv %s868
    %vm891 = vcmp.ge.s32.totalorder %v867, %v890
    %v892 = vstv %s869
    %vm893 = vcmp.lt.s32.totalorder %v867, %v892
    %vm894 = vmand %vm891, %vm893
    %v895 = vsel %vm894, 1, 0
    %v896 = vcvt.s32.f32 %v895
    %v897 = vstv %s889
    %v898 = vmul.f32 %v896, %v897
    %vm899 = vcmp.ge.s32.totalorder %v864, %v890
    %vm900 = vcmp.ge.s32.totalorder %v865, %v890
    %vm901 = vcmp.lt.s32.totalorder %v864, %v892
    %vm902 = vcmp.lt.s32.totalorder %v865, %v892
    %vm903 = vmand %vm899, %vm901
    %vm904 = vmand %vm900, %vm902
    %v905 = vsel %vm903, 1, 0
    %v906 = vsel %vm904, 1, 0
    %v907 = vcvt.s32.f32 %v905
    %v908 = vcvt.s32.f32 %v906
    %s909 = sld [smem:[#allocation3 + $0x2]]
    %s910 = sld [smem:[#allocation3 + $0x3]]
    %s911 = ssub.s32 %s910, %s909
    %p912 = scmp.gt.s32.totalorder %s911, 1
    %s913 = scalar_select %p912, %s911, 1
    %s914 = scvt.s32.f32 %s913
    %v915 = vstv %s914
    %v916 = vrcp.pop %v915
    %v917 = vmul.f32 %v915, %v916
    %v918 = vsub.f32 1.0, %v917
    %v919 = vmul.f32 %v916, %v918
    %v920 = vadd.f32 %v916, %v919
    %vm921 = vweird.f32 %v915
    %vm922 = vweird.f32 %v916
    %vm923 = vmor %vm921, %vm922
    %v924 = vsel %vm923, %v916, %v920
    %v925 = vand.u32 2147483647, %v915
    %vm926 = vcmp.eq.f32.partialorder %v925, 8.507059e+37
    %v927 = vand.u32 %v915, 2147483648
    %v928 = vor.u32 1.1754944e-38, %v927
    %v929 = vsel %vm926, %v928, %v924
    %s930 = vtos %v929
    %v931 = vstv %s909
    %vm932 = vcmp.ge.s32.totalorder %v867, %v931
    %v933 = vstv %s910
    %vm934 = vcmp.lt.s32.totalorder %v867, %v933
    %vm935 = vmand %vm932, %vm934
    %v936 = vsel %vm935, 1, 0
    %v937 = vcvt.s32.f32 %v936
    %v938 = vstv %s930
    %v939 = vmul.f32 %v937, %v938
    %vm940 = vcmp.ge.s32.totalorder %v864, %v931
    %vm941 = vcmp.ge.s32.totalorder %v865, %v931
    %vm942 = vcmp.lt.s32.totalorder %v864, %v933
    %vm943 = vcmp.lt.s32.totalorder %v865, %v933
    %vm944 = vmand %vm940, %vm942
    %vm945 = vmand %vm941, %vm943
    %v946 = vsel %vm944, 1, 0
    %v947 = vsel %vm945, 1, 0
    %v948 = vcvt.s32.f32 %v946
    %v949 = vcvt.s32.f32 %v947
    %s950 = sld [smem:[#allocation3 + $0x80]]
    %s951 = sadd.s32 %s950, 8
    %s952 = sld [smem:[#allocation3 + $0x81]]
    %s953 = sadd.s32 %s952, 8
    %s954 = ssub.s32 %s952, %s950
    %p955 = scmp.gt.s32.totalorder %s954, 1
    %s956 = scalar_select %p955, %s954, 1
    %s957 = scvt.s32.f32 %s956
    %v958 = vstv %s957
    %v959 = vrcp.pop %v958
    %v960 = vmul.f32 %v958, %v959
    %v961 = vsub.f32 1.0, %v960
    %v962 = vmul.f32 %v959, %v961
    %v963 = vadd.f32 %v959, %v962
    %vm964 = vweird.f32 %v958
    %vm965 = vweird.f32 %v959
    %vm966 = vmor %vm964, %vm965
    %v967 = vsel %vm966, %v959, %v963
    %v968 = vand.u32 2147483647, %v958
    %vm969 = vcmp.eq.f32.partialorder %v968, 8.507059e+37
    %v970 = vand.u32 %v958, 2147483648
    %v971 = vor.u32 1.1754944e-38, %v970
    %v972 = vsel %vm969, %v971, %v967
    %s973 = vtos %v972
    %v974 = vstv %s951
    %vm975 = vcmp.ge.s32.totalorder %v867, %v974
    %v976 = vstv %s953
    %vm977 = vcmp.lt.s32.totalorder %v867, %v976
    %vm978 = vmand %vm975, %vm977
    %v979 = vsel %vm978, 1, 0
    %v980 = vcvt.s32.f32 %v979
    %v981 = vstv %s973
    %v982 = vmul.f32 %v980, %v981
    %vm983 = vcmp.ge.s32.totalorder %v864, %v974
    %vm984 = vcmp.ge.s32.totalorder %v865, %v974
    %vm985 = vcmp.lt.s32.totalorder %v864, %v976
    %vm986 = vcmp.lt.s32.totalorder %v865, %v976
    %vm987 = vmand %vm983, %vm985
    %vm988 = vmand %vm984, %vm986
    %v989 = vsel %vm987, 1, 0
    %v990 = vsel %vm988, 1, 0
    %v991 = vcvt.s32.f32 %v989
    %v992 = vcvt.s32.f32 %v990
    %s993 = sld [smem:[#allocation3 + $0x82]]
    %s994 = sadd.s32 %s993, 8
    %s995 = sld [smem:[#allocation3 + $0x83]]
    %s996 = sadd.s32 %s995, 8
    %s997 = ssub.s32 %s995, %s993
    %p998 = scmp.gt.s32.totalorder %s997, 1
    %s999 = scalar_select %p998, %s997, 1
    %s1000 = scvt.s32.f32 %s999
    %v1001 = vstv %s1000
    %v1002 = vrcp.pop %v1001
    %v1003 = vmul.f32 %v1001, %v1002
    %v1004 = vsub.f32 1.0, %v1003
    %v1005 = vmul.f32 %v1002, %v1004
    %v1006 = vadd.f32 %v1002, %v1005
    %vm1007 = vweird.f32 %v1001
    %vm1008 = vweird.f32 %v1002
    %vm1009 = vmor %vm1007, %vm1008
    %v1010 = vsel %vm1009, %v1002, %v1006
    %v1011 = vand.u32 2147483647, %v1001
    %vm1012 = vcmp.eq.f32.partialorder %v1011, 8.507059e+37
    %v1013 = vand.u32 %v1001, 2147483648
    %v1014 = vor.u32 1.1754944e-38, %v1013
    %v1015 = vsel %vm1012, %v1014, %v1010
    %s1016 = vtos %v1015
    %v1017 = vstv %s994
    %vm1018 = vcmp.ge.s32.totalorder %v867, %v1017
    %v1019 = vstv %s996
    %vm1020 = vcmp.lt.s32.totalorder %v867, %v1019
    %vm1021 = vmand %vm1018, %vm1020
    %v1022 = vsel %vm1021, 1, 0
    %v1023 = vcvt.s32.f32 %v1022
    %v1024 = vstv %s1016
    %v1025 = vmul.f32 %v1023, %v1024
    %vm1026 = vcmp.ge.s32.totalorder %v864, %v1017
    %vm1027 = vcmp.ge.s32.totalorder %v865, %v1017
    %vm1028 = vcmp.lt.s32.totalorder %v864, %v1019
    %vm1029 = vcmp.lt.s32.totalorder %v865, %v1019
    %vm1030 = vmand %vm1026, %vm1028
    %vm1031 = vmand %vm1027, %vm1029
    %v1032 = vsel %vm1030, 1, 0
    %v1033 = vsel %vm1031, 1, 0
    %v1034 = vcvt.s32.f32 %v1032
    %v1035 = vcvt.s32.f32 %v1033
    %vm1036 = vcmask 1040384
    %v1037 = vsel %vm1036, %v898, %v939
    %vm1038 = vcmask 1041408
    %v1039 = vsel %vm1038, %v1037, %v982
    %vm1040 = vcmask 1042432
    %v1041 = vsel %vm1040, %v1039, %v1025
    %vm1042 = vcmask 7168
    %v1043 = vsel %vm1042, %v907, %v948
    %v1044 = vsel %vm1042, %v908, %v949
    %vm1045 = vcmask 15360
    %v1046 = vsel %vm1045, %v1043, %v991
    %v1047 = vsel %vm1045, %v1044, %v992
    %vm1048 = vcmask 23552
    %v1049 = vsel %vm1048, %v1046, %v1034
    %v1050 = vsel %vm1048, %v1047, %v1035
    %v1051 = vld [vmem:[%s6 + $0x7] sm:$0x1]
    %v1052 = vld [vmem:[%s6 + $0x8] sm:$0x1]
    %v1053 = vld [vmem:[%s6 + $0x11] sm:$0x1]
    %v1055 = vsel %vm479, %v1041, 0
    %1057 = vmatpush.msra.mxu0 0.0
    %1058 = vmatpush.msra.mxu0 0.0
    %1059 = vmatpush.msra.mxu0 0.0
    %1060 = vmatpush.msra.mxu0 0.0
    %1061 = vmatpush.msra.mxu0 0.0
    %1062 = vmatpush.msra.mxu0 0.0
    %1063 = vmatpush.msra.mxu0 0.0
    %1064 = vmatpush.msra.mxu0 0.0
    %1065 = vmatpush.msra.mxu0 0.0
    %1066 = vmatpush.msra.mxu0 0.0
    %1067 = vmatpush.msra.mxu0 0.0
    %1068 = vmatpush.msra.mxu0 0.0
    %1069 = vmatpush.msra.mxu0 0.0
    %1070 = vmatpush.msra.mxu0 0.0
    %1071 = vmatpush.msra.mxu0 %v284
    %1072 = vmatpush.msra.mxu0 %v261
    %1073 = vmatmul.f32.gmra.mxu0 %v1055
    %v1074 = vpop.f32.mrf.mxu0
    %v1075 = vadd.f32 0.0, %v1074
    %1076 = vdwg.mxu0
    %v1077 = vperm.slane %v1051, 0
    %v1078 = vmul.f32 %v1075, %v1077
    %vm1079 = vcmask 257024
    %v1080 = vsel %vm1079, %v1078, 0.0
    %1081 = vadd.xlane.f32.xlu0 %v1080
    %v1082 = vpop.xlane.xlu0 %1081
    %v1083 = vperm.slane %v1052, 0
    %v1084 = vmul.f32 %v595, %v1083
    %v1085 = vmul.f32 %v618, %v1083
    %v1086 = vsel %vm66, %v1084, 0.0
    %1087 = vadd.xlane.f32.xlu0 %v1086
    %v1088 = vpop.xlane.xlu0 %1087
    %v1089 = vsel %vm66, %v1085, 0.0
    %1090 = vadd.xlane.f32.xlu0 %v1089
    %v1091 = vpop.xlane.xlu0 %1090
    %v1092 = vmul.f32 %v674, %v1083
    %v1093 = vmul.f32 %v699, %v1083
    %v1094 = vsel %vm66, %v1092, 0.0
    %1095 = vadd.xlane.f32.xlu0 %v1094
    %v1096 = vpop.xlane.xlu0 %1095
    %v1097 = vsel %vm66, %v1093, 0.0
    %1098 = vadd.xlane.f32.xlu0 %v1097
    %v1099 = vpop.xlane.xlu0 %1098
    %v1100 = vmul.f32 %v755, %v1083
    %v1101 = vmul.f32 %v780, %v1083
    %v1102 = vsel %vm66, %v1100, 0.0
    %1103 = vadd.xlane.f32.xlu0 %v1102
    %v1104 = vpop.xlane.xlu0 %1103
    %v1105 = vsel %vm66, %v1101, 0.0
    %1106 = vadd.xlane.f32.xlu0 %v1105
    %v1107 = vpop.xlane.xlu0 %1106
    %v1108 = vmul.f32 %v836, %v1083
    %v1109 = vmul.f32 %v861, %v1083
    %v1110 = vsel %vm66, %v1108, 0.0
    %1111 = vadd.xlane.f32.xlu0 %v1110
    %v1112 = vpop.xlane.xlu0 %1111
    %v1113 = vsel %vm66, %v1109, 0.0
    %1114 = vadd.xlane.f32.xlu0 %v1113
    %v1115 = vpop.xlane.xlu0 %1114
    %v1116 = vsel %vm1042, %v1088, %v1096
    %v1117 = vsel %vm1042, %v1091, %v1099
    %v1118 = vsel %vm1045, %v1116, %v1104
    %v1119 = vsel %vm1045, %v1117, %v1107
    %v1120 = vsel %vm1048, %v1118, %v1112
    %v1121 = vsel %vm1048, %v1119, %v1115
    %1122 = vmatpush.msra.mxu0 0.0
    %1123 = vmatpush.msra.mxu0 0.0
    %1124 = vmatpush.msra.mxu0 0.0
    %1125 = vmatpush.msra.mxu0 0.0
    %1126 = vmatpush.msra.mxu0 0.0
    %1127 = vmatpush.msra.mxu0 0.0
    %1128 = vmatpush.msra.mxu0 0.0
    %1129 = vmatpush.msra.mxu0 0.0
    %1130 = vmatpush.msra.mxu0 0.0
    %1131 = vmatpush.msra.mxu0 0.0
    %1132 = vmatpush.msra.mxu0 0.0
    %1133 = vmatpush.msra.mxu0 0.0
    %1134 = vmatpush.msra.mxu0 0.0
    %1135 = vmatpush.msra.mxu0 0.0
    %1136 = vmatpush.msra.mxu0 %v1121
    %1137 = vmatpush.msra.mxu0 %v1120
    %1138 = vmatmul.f32.gmra.mxu0 %v1055
    %v1139 = vpop.f32.mrf.mxu0
    %v1140 = vadd.f32 0.0, %v1139
    %1141 = vdwg.mxu0
    %vm1142 = vcmp.lt.s32.totalorder %v864, 0
    %v1143 = vsub.s32 0, %v864
    %v1144 = vsel %vm1142, %v1143, %v864
    %v1145 = vshrl.u32 %v1144, 1
    %v1146 = vand.u32 %v1144, 1
    %v1147 = vsub.s32 0, %v1146
    %v1148 = vsel %vm1142, %v1147, %v1146
    %vm1149 = vcmp.ne.s32.totalorder %v1148, 0
    %vm1150 = vcmp.lt.s32.totalorder %v1148, 0
    %vm1151 = vmand %vm1150, %vm1149
    %v1152 = vadd.s32 %v1148, 2
    %v1153 = vsel %vm1151, %v1152, %v1148
    %vm1154 = vcmp.eq.s32.totalorder %v1153, 0
    %v1155 = vsel %vm1154, 1, 0
    %vm1156 = vcmp.eq.s32.totalorder %v1155, 1
    %1158 = vrot.lane.b32.xlu0 %v1140, 126
    %v1159 = vpop.permute.xlu0 %1158
    %v1161 = vsel %vm1156, %v1140, %v1159
    %v1162 = vld [vmem:[%s3] sm:$0x1]
    %v1163 = vld [vmem:[%s3 + $0x1] sm:$0x1]
    %v1165 = vrot.slane %v1162, 7
    %1166 = vrot.lane.b32.xlu0 %v1165, 126
    %v1167 = vpop.permute.xlu0 %1166
    %v1170 = vrot.slane %v1163, 6
    %v1172 = vrot.slane %v1163, 5
    %1173 = vrot.lane.b32.xlu0 %v1172, 126
    %v1174 = vpop.permute.xlu0 %1173
    %v1176 = vsel %vm1036, %v1162, %v1167
    %v1177 = vsel %vm1038, %v1176, %v1170
    %v1178 = vsel %vm1040, %v1177, %v1174
    %v1179 = vadd.f32 %v1082, %v1161
    %s1181 = vtos %v1053
    %v1182 = vstv %s1181
    %v1184 = vadd.f32 %v1179, %v1182
    %vm1185 = vcmp.ge.f32.partialorder %v1184, 0.0
    %v1186 = vmul.f32 %v1184, 0.01
    %v1187 = vsel %vm1185, %v1184, %v1186
    %1188 = vrot.lane.b32.xlu0 %v1053, 127
    %v1189 = vpop.permute.xlu0 %1188
    %s1190 = vtos %v1189
    %v1191 = vstv %s1190
    %v1193 = vmul.f32 %v1191, %v1178
    %1195 = vrot.lane.b32.xlu0 %v1193, 120
    %v1196 = vpop.permute.xlu0 %1195
    %v1198 = vadd.f32 %v1187, %v1196
    %1199 = vrot.lane.b32.xlu0 %v1053, 126
    %v1200 = vpop.permute.xlu0 %1199
    %s1201 = vtos %v1200
    %v1202 = vstv %s1201
    %v1204 = vadd.f32 %v1198, %v1202
    %vm1205 = vcmask 11264
    %v1206 = vsel %vm1205, %v1204, -inf
    %1207 = vmax.xlane.f32.xlu0 %v1206
    %v1208 = vpop.xlane.xlu0 %1207
    %v1209 = vsub.f32 %v1204, %v1208
    %v1210 = vmul.f32 %v1209, 1.442695
    %v1211 = vpow.pop %v1210
    %v1212 = vsel %vm1205, %v1211, 0.0
    %1213 = vadd.xlane.f32.xlu0 %v1212
    %v1214 = vpop.xlane.xlu0 %1213
    %v1215 = vrcp.pop %v1214
    %v1216 = vmul.f32 %v1211, %v1215
    %v1217 = vsel %vm1045, %v1216, 0.0
    %1219 = vrot.lane.b32.xlu0 %v1216, 2
    %v1220 = vpop.permute.xlu0 %1219
    %v1222 = vsel %vm1045, 0.0, %v1220
    %v1223 = vsel %vm1156, %v1217, %v1222
    %vm1224 = vcmask 31744
    %v1226 = vsel %vm1224, %v1049, 0
    %v1229 = vsel %vm1224, %v1050, 0
    %vm1231 = vcmask 1043456
    %v1233 = vsel %vm1231, %v1223, 0
    %1235 = vmatpush.msra.mxu0 0.0
    %1236 = vmatpush.msra.mxu0 0.0
    %1237 = vmatpush.msra.mxu0 0.0
    %1238 = vmatpush.msra.mxu0 0.0
    %1239 = vmatpush.msra.mxu0 0.0
    %1240 = vmatpush.msra.mxu0 0.0
    %1241 = vmatpush.msra.mxu0 0.0
    %1242 = vmatpush.msra.mxu0 0.0
    %1243 = vmatpush.msra.mxu0 0.0
    %1244 = vmatpush.msra.mxu0 0.0
    %1245 = vmatpush.msra.mxu0 0.0
    %1246 = vmatpush.msra.mxu0 0.0
    %1247 = vmatpush.msra.mxu0 0.0
    %1248 = vmatpush.msra.mxu0 0.0
    %1249 = vmatpush.msra.mxu0 0.0
    %1250 = vmatpush.msra.mxu0 %v1233
    %1251 = vmatmul.f32.gmra.mxu0 %v1226
    %v1252 = vpop.f32.mrf.mxu0
    %v1253 = vadd.f32 0.0, %v1252
    %1254 = vmatmul.f32.gmra.mxu0 %v1229
    %v1255 = vpop.f32.mrf.mxu0
    %v1256 = vadd.f32 0.0, %v1255
    %1257 = vdwg.mxu0
    %1259 = vset.pattern.permute.xlu0 0
    %1260 = vperm.xlu0 %1259, %v1253
    %v1261 = vpop.permute.xlu0 %1260
    %1264 = vset.pattern.permute.xlu0 0
    %1265 = vperm.xlu0 %1264, %v1256
    %v1266 = vpop.permute.xlu0 %1265
    %v1268 = vmul.f32 %v1261, %v595
    %v1269 = vmul.f32 %v1266, %v618
    %v1270 = vadd.f32 %v261, %v1268
    %v1271 = vadd.f32 %v284, %v1269
    %1272 = vset.pattern.permute.xlu0 1
    %1273 = vperm.xlu0 %1272, %v1253
    %v1274 = vpop.permute.xlu0 %1273
    %1276 = vset.pattern.permute.xlu0 1
    %1277 = vperm.xlu0 %1276, %v1256
    %v1278 = vpop.permute.xlu0 %1277
    %v1280 = vmul.f32 %v1274, %v674
    %v1281 = vmul.f32 %v1278, %v699
    %v1282 = vadd.f32 %v1270, %v1280
    %v1283 = vadd.f32 %v1271, %v1281
    %1284 = vset.pattern.permute.xlu0 2
    %1285 = vperm.xlu0 %1284, %v1253
    %v1286 = vpop.permute.xlu0 %1285
    %1288 = vset.pattern.permute.xlu0 2
    %1289 = vperm.xlu0 %1288, %v1256
    %v1290 = vpop.permute.xlu0 %1289
    %v1292 = vmul.f32 %v1286, %v755
    %v1293 = vmul.f32 %v1290, %v780
    %v1294 = vadd.f32 %v1282, %v1292
    %v1295 = vadd.f32 %v1283, %v1293
    %1296 = vset.pattern.permute.xlu0 3
    %1297 = vperm.xlu0 %1296, %v1253
    %v1298 = vpop.permute.xlu0 %1297
    %1300 = vset.pattern.permute.xlu0 3
    %1301 = vperm.xlu0 %1300, %v1256
    %v1302 = vpop.permute.xlu0 %1301
    %v1304 = vmul.f32 %v1298, %v836
    %v1305 = vmul.f32 %v1302, %v861
    %v1306 = vadd.f32 %v1294, %v1304
    %v1307 = vadd.f32 %v1295, %v1305
    %v1308 = vld [vmem:[#allocation5 + $0x20] sm:$0xff]
    %v1309 = vld [vmem:[#allocation5 + $0x28] sm:$0xff]
    %v1310 = vld [vmem:[#allocation5 + $0x30] sm:$0xff]
    %v1311 = vld [vmem:[#allocation5 + $0x70] sm:$0xff]
    %v1312 = vld [vmem:[#allocation5 + $0x78] sm:$0xff]
    %v1313 = vld [vmem:[#allocation5 + $0x80] sm:$0xff]
    %v1314 = vld [vmem:[#allocation5 + $0xc0] sm:$0xff]
    %v1315 = vld [vmem:[#allocation5 + $0xc8] sm:$0xff]
    %v1316 = vld [vmem:[#allocation5 + $0xd0] sm:$0xff]
    %v1317 = vld [vmem:[#allocation5 + $0x110] sm:$0xff]
    %v1318 = vld [vmem:[#allocation5 + $0x118] sm:$0xff]
    %v1319 = vld [vmem:[#allocation5 + $0x120] sm:$0xff]
    %v1321 = vsel %vm66, %v1306, 0
    %v1324 = vsel %vm66, %v1307, 0
    %1326 = vmatpush.msra.mxu0 0.0
    %1327 = vmatpush.msra.mxu0 0.0
    %1328 = vmatpush.msra.mxu0 0.0
    %1329 = vmatpush.msra.mxu0 0.0
    %1330 = vmatpush.msra.mxu0 0.0
    %1331 = vmatpush.msra.mxu0 0.0
    %1332 = vmatpush.msra.mxu0 0.0
    %1333 = vmatpush.msra.mxu0 0.0
    %1334 = vmatpush.msra.mxu0 0.0
    %1335 = vmatpush.msra.mxu0 0.0
    %1336 = vmatpush.msra.mxu0 0.0
    %1337 = vmatpush.msra.mxu0 0.0
    %1338 = vmatpush.msra.mxu0 %v1317
    %1339 = vmatpush.msra.mxu0 %v1314
    %1340 = vmatpush.msra.mxu0 %v1311
    %1341 = vmatpush.msra.mxu0 %v1308
    %1342 = vmatmul.f32.gmra.mxu0 %v1321
    %v1343 = vpop.f32.mrf.mxu0
    %v1344 = vadd.f32 0.0, %v1343
    %1345 = vmatmul.f32.gmra.mxu0 %v1324
    %v1346 = vpop.f32.mrf.mxu0
    %v1347 = vadd.f32 0.0, %v1346
    %1348 = vdwg.mxu0
    %1349 = vmatpush.msra.mxu0 0.0
    %1350 = vmatpush.msra.mxu0 0.0
    %1351 = vmatpush.msra.mxu0 0.0
    %1352 = vmatpush.msra.mxu0 0.0
    %1353 = vmatpush.msra.mxu0 0.0
    %1354 = vmatpush.msra.mxu0 0.0
    %1355 = vmatpush.msra.mxu0 0.0
    %1356 = vmatpush.msra.mxu0 0.0
    %1357 = vmatpush.msra.mxu0 0.0
    %1358 = vmatpush.msra.mxu0 0.0
    %1359 = vmatpush.msra.mxu0 0.0
    %1360 = vmatpush.msra.mxu0 0.0
    %1361 = vmatpush.msra.mxu0 %v1318
    %1362 = vmatpush.msra.mxu0 %v1315
    %1363 = vmatpush.msra.mxu0 %v1312
    %1364 = vmatpush.msra.mxu0 %v1309
    %1365 = vmatmul.f32.gmra.mxu0 %v1321
    %v1366 = vpop.f32.mrf.mxu0
    %v1367 = vadd.f32 0.0, %v1366
    %1368 = vmatmul.f32.gmra.mxu0 %v1324
    %v1369 = vpop.f32.mrf.mxu0
    %v1370 = vadd.f32 0.0, %v1369
    %1371 = vdwg.mxu0
    %1372 = vmatpush.msra.mxu0 0.0
    %1373 = vmatpush.msra.mxu0 0.0
    %1374 = vmatpush.msra.mxu0 0.0
    %1375 = vmatpush.msra.mxu0 0.0
    %1376 = vmatpush.msra.mxu0 0.0
    %1377 = vmatpush.msra.mxu0 0.0
    %1378 = vmatpush.msra.mxu0 0.0
    %1379 = vmatpush.msra.mxu0 0.0
    %1380 = vmatpush.msra.mxu0 0.0
    %1381 = vmatpush.msra.mxu0 0.0
    %1382 = vmatpush.msra.mxu0 0.0
    %1383 = vmatpush.msra.mxu0 0.0
    %1384 = vmatpush.msra.mxu0 %v1319
    %1385 = vmatpush.msra.mxu0 %v1316
    %1386 = vmatpush.msra.mxu0 %v1313
    %1387 = vmatpush.msra.mxu0 %v1310
    %1388 = vmatmul.f32.gmra.mxu0 %v1321
    %v1389 = vpop.f32.mrf.mxu0
    %v1390 = vadd.f32 0.0, %v1389
    %1391 = vmatmul.f32.gmra.mxu0 %v1324
    %v1392 = vpop.f32.mrf.mxu0
    %v1393 = vadd.f32 0.0, %v1392
    %1394 = vdwg.mxu0
    %v1395 = vld [vmem:[%s6 + $0x4] sm:$0x1]
    %v1396 = vperm.slane %v1395, 0
    %v1397 = vadd.f32 %v1344, %v1396
    %v1398 = vadd.f32 %v1347, %v1396
    %v1399 = vld [vmem:[%s6 + $0x5] sm:$0x1]
    %v1400 = vperm.slane %v1399, 0
    %v1401 = vadd.f32 %v1367, %v1400
    %v1402 = vadd.f32 %v1370, %v1400
    %v1403 = vld [vmem:[%s6 + $0x6] sm:$0x1]
    %v1404 = vperm.slane %v1403, 0
    %v1405 = vadd.f32 %v1390, %v1404
    %v1406 = vadd.f32 %v1393, %v1404
    %v1408 = vsel %vm479, %v1397, 0
    %v1411 = vsel %vm479, %v1401, 0
    %1413 = vmatpush.xpose.msra.mxu0 0.0
    %1414 = vmatpush.xpose.msra.mxu0 0.0
    %1415 = vmatpush.xpose.msra.mxu0 0.0
    %1416 = vmatpush.xpose.msra.mxu0 0.0
    %1417 = vmatpush.xpose.msra.mxu0 0.0
    %1418 = vmatpush.xpose.msra.mxu0 0.0
    %1419 = vmatpush.xpose.msra.mxu0 0.0
    %1420 = vmatpush.xpose.msra.mxu0 0.0
    %1421 = vmatpush.xpose.msra.mxu0 0.0
    %1422 = vmatpush.xpose.msra.mxu0 0.0
    %1423 = vmatpush.xpose.msra.mxu0 0.0
    %1424 = vmatpush.xpose.msra.mxu0 0.0
    %1425 = vmatpush.xpose.msra.mxu0 0.0
    %1426 = vmatpush.xpose.msra.mxu0 0.0
    %1427 = vmatpush.xpose.msra.mxu0 0.0
    %1428 = vmatpush.xpose.msra.mxu0 %v1411
    %1429 = vmatmul.f32.gmra.mxu0 %v1408
    %v1430 = vpop.f32.mrf.mxu0
    %v1431 = vadd.f32 0.0, %v1430
    %1432 = vdwg.mxu0
    %v1434 = vsel %vm479, %v1398, 0
    %v1437 = vsel %vm479, %v1402, 0
    %1439 = vmatpush.xpose.msra.mxu0 0.0
    %1440 = vmatpush.xpose.msra.mxu0 0.0
    %1441 = vmatpush.xpose.msra.mxu0 0.0
    %1442 = vmatpush.xpose.msra.mxu0 0.0
    %1443 = vmatpush.xpose.msra.mxu0 0.0
    %1444 = vmatpush.xpose.msra.mxu0 0.0
    %1445 = vmatpush.xpose.msra.mxu0 0.0
    %1446 = vmatpush.xpose.msra.mxu0 0.0
    %1447 = vmatpush.xpose.msra.mxu0 0.0
    %1448 = vmatpush.xpose.msra.mxu0 0.0
    %1449 = vmatpush.xpose.msra.mxu0 0.0
    %1450 = vmatpush.xpose.msra.mxu0 0.0
    %1451 = vmatpush.xpose.msra.mxu0 0.0
    %1452 = vmatpush.xpose.msra.mxu0 0.0
    %1453 = vmatpush.xpose.msra.mxu0 0.0
    %1454 = vmatpush.xpose.msra.mxu0 %v1437
    %1455 = vmatmul.f32.gmra.mxu0 %v1434
    %v1456 = vpop.f32.mrf.mxu0
    %v1457 = vadd.f32 0.0, %v1456
    %1458 = vdwg.mxu0
    %v1459 = vmul.f32 %v1431, 0.25
    %v1460 = vmul.f32 %v1457, 0.25
    %v1461 = vsel %vm217, %v1459, -inf
    %1462 = vmax.xlane.f32.xlu0 %v1461
    %v1463 = vpop.xlane.xlu0 %1462
    %v1464 = vsel %vm217, %v1460, -inf
    %1465 = vmax.xlane.f32.xlu0 %v1464
    %v1466 = vpop.xlane.xlu0 %1465
    %v1467 = vsub.f32 %v1459, %v1463
    %v1468 = vsub.f32 %v1460, %v1466
    %v1469 = vmul.f32 %v1467, 1.442695
    %v1470 = vpow.pop %v1469
    %v1471 = vmul.f32 %v1468, 1.442695
    %v1472 = vpow.pop %v1471
    %v1473 = vsel %vm217, %v1470, 0.0
    %1474 = vadd.xlane.f32.xlu0 %v1473
    %v1475 = vpop.xlane.xlu0 %1474
    %v1476 = vsel %vm217, %v1472, 0.0
    %1477 = vadd.xlane.f32.xlu0 %v1476
    %v1478 = vpop.xlane.xlu0 %1477
    %v1479 = vrcp.pop %v1475
    %v1480 = vrcp.pop %v1478
    %v1481 = vmul.f32 %v1470, %v1479
    %v1482 = vmul.f32 %v1472, %v1480
    %v1484 = vsel %vm217, %v1481, 0
    %1486 = vmatpush.msra.mxu0 0.0
    %1487 = vmatpush.msra.mxu0 0.0
    %1488 = vmatpush.msra.mxu0 0.0
    %1489 = vmatpush.msra.mxu0 0.0
    %1490 = vmatpush.msra.mxu0 0.0
    %1491 = vmatpush.msra.mxu0 0.0
    %1492 = vmatpush.msra.mxu0 0.0
    %1493 = vmatpush.msra.mxu0 0.0
    %1494 = vmatpush.msra.mxu0 0.0
    %1495 = vmatpush.msra.mxu0 0.0
    %1496 = vmatpush.msra.mxu0 0.0
    %1497 = vmatpush.msra.mxu0 0.0
    %1498 = vmatpush.msra.mxu0 0.0
    %1499 = vmatpush.msra.mxu0 0.0
    %1500 = vmatpush.msra.mxu0 0.0
    %1501 = vmatpush.msra.mxu0 %v1405
    %1502 = vmatmul.f32.gmra.mxu0 %v1484
    %v1503 = vpop.f32.mrf.mxu0
    %v1504 = vadd.f32 0.0, %v1503
    %1505 = vdwg.mxu0
    %v1507 = vsel %vm217, %v1482, 0
    %1509 = vmatpush.msra.mxu0 0.0
    %1510 = vmatpush.msra.mxu0 0.0
    %1511 = vmatpush.msra.mxu0 0.0
    %1512 = vmatpush.msra.mxu0 0.0
    %1513 = vmatpush.msra.mxu0 0.0
    %1514 = vmatpush.msra.mxu0 0.0
    %1515 = vmatpush.msra.mxu0 0.0
    %1516 = vmatpush.msra.mxu0 0.0
    %1517 = vmatpush.msra.mxu0 0.0
    %1518 = vmatpush.msra.mxu0 0.0
    %1519 = vmatpush.msra.mxu0 0.0
    %1520 = vmatpush.msra.mxu0 0.0
    %1521 = vmatpush.msra.mxu0 0.0
    %1522 = vmatpush.msra.mxu0 0.0
    %1523 = vmatpush.msra.mxu0 0.0
    %1524 = vmatpush.msra.mxu0 %v1406
    %1525 = vmatmul.f32.gmra.mxu0 %v1507
    %v1526 = vpop.f32.mrf.mxu0
    %v1527 = vadd.f32 0.0, %v1526
    %1528 = vdwg.mxu0
    %s1529 = sld [smem:[#allocation4]]
    %v1530 = vstv %s1529
    %vm1531 = vcmp.eq.s32.totalorder %v867, %v1530
    %v1532 = vsel %vm1531, 1, 0
    %v1533 = vcvt.s32.f32 %v1532
    %s1534 = sld [smem:[#allocation4 + $0x1]]
    %v1535 = vstv %s1534
    %vm1536 = vcmp.eq.s32.totalorder %v867, %v1535
    %v1537 = vsel %vm1536, 1, 0
    %v1538 = vcvt.s32.f32 %v1537
    %s1539 = sld [smem:[#allocation4 + $0x2]]
    %v1540 = vstv %s1539
    %vm1541 = vcmp.eq.s32.totalorder %v867, %v1540
    %v1542 = vsel %vm1541, 1, 0
    %v1543 = vcvt.s32.f32 %v1542
    %s1544 = sld [smem:[#allocation4 + $0x3]]
    %v1545 = vstv %s1544
    %vm1546 = vcmp.eq.s32.totalorder %v867, %v1545
    %v1547 = vsel %vm1546, 1, 0
    %v1548 = vcvt.s32.f32 %v1547
    %s1549 = sld [smem:[#allocation4 + $0x4]]
    %v1550 = vstv %s1549
    %vm1551 = vcmp.eq.s32.totalorder %v867, %v1550
    %v1552 = vsel %vm1551, 1, 0
    %v1553 = vcvt.s32.f32 %v1552
    %s1554 = sld [smem:[#allocation4 + $0x5]]
    %v1555 = vstv %s1554
    %vm1556 = vcmp.eq.s32.totalorder %v867, %v1555
    %v1557 = vsel %vm1556, 1, 0
    %v1558 = vcvt.s32.f32 %v1557
    %s1559 = sld [smem:[#allocation4 + $0x6]]
    %v1560 = vstv %s1559
    %vm1561 = vcmp.eq.s32.totalorder %v867, %v1560
    %v1562 = vsel %vm1561, 1, 0
    %v1563 = vcvt.s32.f32 %v1562
    %s1564 = sld [smem:[#allocation4 + $0x7]]
    %v1565 = vstv %s1564
    %vm1566 = vcmp.eq.s32.totalorder %v867, %v1565
    %v1567 = vsel %vm1566, 1, 0
    %v1568 = vcvt.s32.f32 %v1567
    %v1569 = vsel %vm1036, %v1533, %v1538
    %v1570 = vsel %vm1038, %v1569, %v1543
    %v1571 = vsel %vm1040, %v1570, %v1548
    %v1572 = vsel %vm1231, %v1571, %v1553
    %vm1573 = vcmask 1044480
    %v1574 = vsel %vm1573, %v1572, %v1558
    %vm1575 = vcmask 1045504
    %v1576 = vsel %vm1575, %v1574, %v1563
    %vm1577 = vcmask 1046528
    %v1578 = vsel %vm1577, %v1576, %v1568
    %v1580 = vsel %vm479, %v1578, 0
    %1582 = vmatpush.msra.mxu0 0.0
    %1583 = vmatpush.msra.mxu0 0.0
    %1584 = vmatpush.msra.mxu0 0.0
    %1585 = vmatpush.msra.mxu0 0.0
    %1586 = vmatpush.msra.mxu0 0.0
    %1587 = vmatpush.msra.mxu0 0.0
    %1588 = vmatpush.msra.mxu0 0.0
    %1589 = vmatpush.msra.mxu0 0.0
    %1590 = vmatpush.msra.mxu0 0.0
    %1591 = vmatpush.msra.mxu0 0.0
    %1592 = vmatpush.msra.mxu0 0.0
    %1593 = vmatpush.msra.mxu0 0.0
    %1594 = vmatpush.msra.mxu0 0.0
    %1595 = vmatpush.msra.mxu0 0.0
    %1596 = vmatpush.msra.mxu0 %v1527
    %1597 = vmatpush.msra.mxu0 %v1504
    %1598 = vmatmul.f32.gmra.mxu0 %v1580
    %v1599 = vpop.f32.mrf.mxu0
    %v1600 = vadd.f32 0.0, %v1599
    %1601 = vdwg.mxu0
    %v1602 = vld [vmem:[#allocation5 + $0x40] sm:$0xff]
    %v1603 = vld [vmem:[#allocation5 + $0x90] sm:$0xff]
    %v1604 = vld [vmem:[#allocation5 + $0xe0] sm:$0xff]
    %v1605 = vld [vmem:[#allocation5 + $0x130] sm:$0xff]
    %v1606 = vld [vmem:[%s6 + $0xd] sm:$0x1]
    %v1607 = vperm.slane %v1606, 0
    %v1609 = vsel %vm66, %v1600, 0
    %1611 = vmatpush.msra.mxu0 0.0
    %1612 = vmatpush.msra.mxu0 0.0
    %1613 = vmatpush.msra.mxu0 0.0
    %1614 = vmatpush.msra.mxu0 0.0
    %1615 = vmatpush.msra.mxu0 0.0
    %1616 = vmatpush.msra.mxu0 0.0
    %1617 = vmatpush.msra.mxu0 0.0
    %1618 = vmatpush.msra.mxu0 0.0
    %1619 = vmatpush.msra.mxu0 0.0
    %1620 = vmatpush.msra.mxu0 0.0
    %1621 = vmatpush.msra.mxu0 0.0
    %1622 = vmatpush.msra.mxu0 0.0
    %1623 = vmatpush.msra.mxu0 %v1605
    %1624 = vmatpush.msra.mxu0 %v1604
    %1625 = vmatpush.msra.mxu0 %v1603
    %1626 = vmatpush.msra.mxu0 %v1602
    %1627 = vmatmul.f32.gmra.mxu0 %v1609
    %v1628 = vpop.f32.mrf.mxu0
    %v1629 = vadd.f32 %v1607, %v1628
    %1630 = vdwg.mxu0
    %v1631 = vmul.f32 %v1629, 0.5
    %v1632 = vmul.f32 %v1629, 0.044715
    %v1633 = vmul.f32 %v1632, %v1629
    %v1634 = vmul.f32 %v1633, %v1629
    %v1635 = vadd.f32 %v1629, %v1634
    %v1636 = vmul.f32 %v1635, 0.7978846
    %v1637 = vtanh.pop %v1636
    %v1638 = vadd.f32 %v1637, 1.0
    %v1639 = vmul.f32 %v1631, %v1638
    %v1640 = vsel %vm66, %v1639, 0.0
    %1641 = vadd.xlane.f32.xlu0 %v1640
    %v1642 = vpop.xlane.xlu0 %1641
    %v1643 = vrcp.pop 32.0
    %v1644 = vmul.f32 32.0, %v1643
    %v1645 = vsub.f32 1.0, %v1644
    %v1646 = vmul.f32 %v1643, %v1645
    %v1647 = vadd.f32 %v1643, %v1646
    %vm1648 = vweird.f32 %v1643
    %v1649 = vsel %vm1648, %v1643, %v1647
    %v1650 = vmul.f32 %v1642, %v1649
    %v1651 = vsub.f32 %v1639, %v1650
    %v1652 = vmul.f32 %v1651, %v1651
    %v1653 = vsel %vm66, %v1652, 0.0
    %1654 = vadd.xlane.f32.xlu0 %v1653
    %v1655 = vpop.xlane.xlu0 %1654
    %v1656 = vmul.f32 %v1655, %v1649
    %v1657 = vadd.f32 %v1656, 1e-12
    %v1658 = vrsqrt.pop %v1657
    %v1659 = vmul.f32 %v1658, %v1657
    %v1660 = vmul.f32 %v1659, %v1658
    %v1661 = vmul.f32 0.5, %v1660
    %v1662 = vsub.f32 1.5, %v1661
    %v1663 = vmul.f32 %v1658, %v1662
    %vm1664 = vweird.f32 %v1657
    %vm1665 = vweird.f32 %v1658
    %vm1666 = vmor %vm1664, %vm1665
    %v1667 = vsel %vm1666, %v1658, %v1663
    %v1668 = vmul.f32 %v1651, %v1667
    %v1669 = vld [vmem:[%s6 + $0xe] sm:$0x1]
    %v1670 = vperm.slane %v1669, 0
    %v1671 = vmul.f32 %v1668, %v1670
    %v1672 = vld [vmem:[%s6 + $0xf] sm:$0x1]
    %v1673 = vperm.slane %v1672, 0
    %v1674 = vadd.f32 %v1671, %v1673
    %v1675 = vld [vmem:[#allocation5 + $0x48] sm:$0xff]
    %v1676 = vld [vmem:[#allocation5 + $0x98] sm:$0xff]
    %v1677 = vld [vmem:[#allocation5 + $0xe8] sm:$0xff]
    %v1678 = vld [vmem:[#allocation5 + $0x138] sm:$0xff]
    %v1679 = vld [vmem:[%s6 + $0x10] sm:$0x1]
    %v1680 = vperm.slane %v1679, 0
    %v1682 = vsel %vm66, %v1674, 0
    %1684 = vmatpush.msra.mxu0 0.0
    %1685 = vmatpush.msra.mxu0 0.0
    %1686 = vmatpush.msra.mxu0 0.0
    %1687 = vmatpush.msra.mxu0 0.0
    %1688 = vmatpush.msra.mxu0 0.0
    %1689 = vmatpush.msra.mxu0 0.0
    %1690 = vmatpush.msra.mxu0 0.0
    %1691 = vmatpush.msra.mxu0 0.0
    %1692 = vmatpush.msra.mxu0 0.0
    %1693 = vmatpush.msra.mxu0 0.0
    %1694 = vmatpush.msra.mxu0 0.0
    %1695 = vmatpush.msra.mxu0 0.0
    %1696 = vmatpush.msra.mxu0 %v1678
    %1697 = vmatpush.msra.mxu0 %v1677
    %1698 = vmatpush.msra.mxu0 %v1676
    %1699 = vmatpush.msra.mxu0 %v1675
    %1700 = vmatmul.f32.gmra.mxu0 %v1682
    %v1701 = vpop.f32.mrf.mxu0
    %v1702 = vadd.f32 %v1680, %v1701
    %1703 = vdwg.mxu0
    %v1704 = vld [vmem:[#allocation5 + $0x38] sm:$0xff]
    %v1705 = vld [vmem:[#allocation5 + $0x88] sm:$0xff]
    %v1706 = vld [vmem:[#allocation5 + $0xd8] sm:$0xff]
    %v1707 = vld [vmem:[#allocation5 + $0x128] sm:$0xff]
    %v1708 = vld [vmem:[%s6 + $0x9] sm:$0x1]
    %v1709 = vperm.slane %v1708, 0
    %v1712 = vrot.slane %v1527, 7
    %vm1713 = vcmask 1041409
    %v1714 = vsel %vm1713, %v1712, %v1504
    %v1715 = vsel %vm66, %v1714, 0
    %1717 = vmatpush.msra.mxu0 0.0
    %1718 = vmatpush.msra.mxu0 0.0
    %1719 = vmatpush.msra.mxu0 0.0
    %1720 = vmatpush.msra.mxu0 0.0
    %1721 = vmatpush.msra.mxu0 0.0
    %1722 = vmatpush.msra.mxu0 0.0
    %1723 = vmatpush.msra.mxu0 0.0
    %1724 = vmatpush.msra.mxu0 0.0
    %1725 = vmatpush.msra.mxu0 0.0
    %1726 = vmatpush.msra.mxu0 0.0
    %1727 = vmatpush.msra.mxu0 0.0
    %1728 = vmatpush.msra.mxu0 0.0
    %1729 = vmatpush.msra.mxu0 %v1707
    %1730 = vmatpush.msra.mxu0 %v1706
    %1731 = vmatpush.msra.mxu0 %v1705
    %1732 = vmatpush.msra.mxu0 %v1704
    %1733 = vmatmul.f32.gmra.mxu0 %v1715
    %v1734 = vpop.f32.mrf.mxu0
    %v1735 = vadd.f32 %v1709, %v1734
    %1736 = vdwg.mxu0
    %v1737 = vmul.f32 %v1735, 0.5
    %v1738 = vmul.f32 %v1735, 0.044715
    %v1739 = vmul.f32 %v1738, %v1735
    %v1740 = vmul.f32 %v1739, %v1735
    %v1741 = vadd.f32 %v1735, %v1740
    %v1742 = vmul.f32 %v1741, 0.7978846
    %v1743 = vtanh.pop %v1742
    %v1744 = vadd.f32 %v1743, 1.0
    %v1745 = vmul.f32 %v1737, %v1744
    %v1746 = vld [vmem:[%s6 + $0xa] sm:$0x1]
    %v1747 = vperm.slane %v1746, 0
    %v1748 = vmul.f32 %v1745, %v1747
    %vm1749 = vcmask 123904
    %v1750 = vsel %vm1749, %v1748, 0.0
    %1751 = vadd.xlane.f32.xlu0 %v1750
    %v1752 = vpop.xlane.xlu0 %1751
    %v1753 = vld [vmem:[%s6 + $0xb] sm:$0x1]
    %v1754 = vperm.slane %v1753, 0
    %v1755 = vmul.f32 %v1745, %v1754
    %v1756 = vsel %vm1749, %v1755, 0.0
    %1757 = vadd.xlane.f32.xlu0 %v1756
    %v1758 = vpop.xlane.xlu0 %1757
    %v1759 = vsel %vm1042, %v1752, %v1758
    %v1760 = vld [vmem:[%s6 + $0xc] sm:$0x1]
    %v1761 = vperm.slane %v1760, 0
    %v1762 = vadd.f32 %v1759, %v1761
    %vm1763 = vcmask 9216
    %v1764 = vsel %vm1763, %v1762, -inf
    %1765 = vmax.xlane.f32.xlu0 %v1764
    %v1766 = vpop.xlane.xlu0 %1765
    %v1767 = vsub.f32 %v1762, %v1766
    %v1768 = vmul.f32 %v1767, 1.442695
    %v1769 = vpow.pop %v1768
    %v1770 = vsel %vm1763, %v1769, 0.0
    %1771 = vadd.xlane.f32.xlu0 %v1770
    %v1772 = vpop.xlane.xlu0 %1771
    %v1773 = vlog2.pop %v1772
    %v1774 = vmul.f32 %v1773, 0.6931472
    %v1775 = vsub.f32 %v1767, %v1774
    %v1776 = vsel %vm1045, %v1775, 0.0
    %v1777 = vsel %vm1038, %v1776, 0.0
    %1778 = vst [vmem:[#allocation8] sm:$0xff] %v1702
    %1779 = vst [vmem:[#allocation8 + $0x8] sm:$0xff] %v1777
    // Predicated region
    $region26: #{tpu_custom_call.1} parent=1 // pred_check
      _
    $region27: #{tpu_custom_call.1} parent=1 // pred_check_branch
      %1781 = sbr.rel (0) target = $region29
    $region28: #{tpu_custom_call.1} parent=1 // pred_region
      %1783 = vsyncadd [#allocation7], 0
      %s1784 = sshll.u32 [#allocation8], 4
      %s1785 = int_to_ptr.vmem [resolvable:$true] %s1784
      %s1786 = sshll.u32 %s7, 4
      %s1787 = int_to_ptr.hbm [resolvable:$true] %s1786
      %1792 = dma.vmem_to_hbm [thread:$0]  %s1785, 256, %s1787, [#allocation7], 128, 128, 8
    $region29: #{tpu_custom_call.1} parent=1 // pred_fallthru
      _
    // Predicated region
    $region30: #{tpu_custom_call.1} parent=1 // pred_check
      _
    $region31: #{tpu_custom_call.1} parent=1 // pred_check_branch
      %1794 = sbr.rel (0) target = $region33
    $region32: #{tpu_custom_call.1} parent=1 // pred_region
      %1796 = dma.done [#allocation7], 256
    $region33: #{tpu_custom_call.1} parent=1 // pred_fallthru
      _
    %1797 = vsyncpa [#allocation6], 1
    %1798 = vsyncpa [#allocation7], 1

</llo_original>
